<compile_context>
chip_gen: v7x
topology: tpu7x:2x2x1
jax: 0.10.0
libtpu: 0.0.40
codegen_flags: <defaults>
</compile_context>

<pallas_src>
import functools

import jax
import jax.numpy as jnp
from jax.experimental import pallas as pl
from jax.experimental.pallas import tpu as pltpu

EPS = 1e-5


def _silu(y):
    # Exact sigmoid (exp lands on the EUP slot); keeps f32 parity with torch.
    return y * jax.nn.sigmoid(y)


def _residual_kernel(matmul_dtype, split_k3,
                     x_ref, w1_ref, w2_ref, w3_ref, off_ref, mask_ref, out_ref):
    """One (NB, C, L) block of whole batch elements, native layout.

    x_ref   : (NB, C, L)  activations
    w1_ref  : (C, C)      conv1 (k=1) weight, BN-folded, matmul_dtype
    w2_ref  : (C, 3C)     conv2 (k=3) weight, taps stacked on the contraction
    w3_ref  : (C, C)      conv3 (k=1) shortcut weight, BN-folded
    off_ref : (3, C, 1)   per-layer folded offsets (f32): (bias-mean)*scale+beta
    mask_ref: (2, 1, L)   {0,1} padding masks for the l-1 / l+1 taps
    """
    NB, C, L = x_ref.shape

    # Constant operands: load once per grid step, hoisted out of the batch loop.
    w1 = w1_ref[...]
    w3 = w3_ref[...]
    off1, off2, off3 = off_ref[0], off_ref[1], off_ref[2]          # (C, 1) f32
    m_prev = mask_ref[0]                                           # (1, L)
    m_next = mask_ref[1]                                           # (1, L)
    if split_k3:
        w2a = w2_ref[:, :C]           # tap k=0 (multiplies a[:, l-1])
        w2b = w2_ref[:, C:2 * C]      # tap k=1
        w2c = w2_ref[:, 2 * C:]       # tap k=2 (multiplies a[:, l+1])
    else:
        w2 = w2_ref[...]

    def body(i):
        x = x_ref[i].astype(matmul_dtype)                          # (C, L)

        # ---- layer 1: k=1 conv (+ folded BN/bias) + SiLU -------------------
        a = _silu(jnp.dot(w1, x, preferred_element_type=jnp.float32) + off1)

        # ---- layer 2: k=3 / pad=1 conv -------------------------------------
        # Shifted taps via XLU roll; boundaries zeroed with precomputed masks.
        am = a.astype(matmul_dtype)
        a_m1 = pltpu.roll(am, shift=1, axis=1) * m_prev            # a[:, l-1]
        a_p1 = pltpu.roll(am, shift=L - 1, axis=1) * m_next        # a[:, l+1]
        if split_k3:
            y = jnp.dot(w2a, a_m1, preferred_element_type=jnp.float32)
            y = y + jnp.dot(w2b, am, preferred_element_type=jnp.float32)
            y = y + jnp.dot(w2c, a_p1, preferred_element_type=jnp.float32)
        else:
            # Deep-K single matmul improves MXU contraction utilization for
            # small C; the (3C, L) buffer is cheap at these sizes.
            x3 = jnp.concatenate([a_m1, am, a_p1], axis=0)         # (3C, L)
            y = jnp.dot(w2, x3, preferred_element_type=jnp.float32)
        b = _silu(y + off2)

        # ---- layer 3 (shortcut): k=1 conv on the original input ------------
        c = _silu(jnp.dot(w3, x, preferred_element_type=jnp.float32) + off3)

        out_ref[i] = (b + c).astype(out_ref.dtype)

    if NB <= 8:                    # short fixed trip count -> full unroll
        for i in range(NB):
            body(i)
    else:
        jax.lax.fori_loop(0, NB, lambda i, carry: body(i), None)


def _vmem_capacity_bytes():
    try:
        return int(pltpu.get_tpu_info().vmem_capacity_bytes)
    except Exception:
        return 64 << 20            # conservative fallback (v7x per-core VMEM)


def _pick_batch_tile(N, C, L, in_itemsize, out_itemsize, mm_itemsize, vmem_cap):
    """Pick NB (batch elements per grid step) and the VMEM limit to request.

    Per-step working set:
      * input / output blocks, double-buffered by the pipeline,
      * constant operands (weights / offsets / masks), counted double-buffered
        even though we request Buffered(1), to stay conservative,
      * in-loop temporaries (f32 accumulators, matmul_dtype copies of x / a,
        three shifted taps, the (3C, L) deep-K buffer) — independent of NB.
    """
    const_bytes = 2 * (5 * C * C * mm_itemsize + 3 * C * 4 + 2 * L * mm_itemsize)
    tmp_bytes = C * L * (6 * 4 + 8 * mm_itemsize)
    fixed = const_bytes + tmp_bytes + (2 << 20)           # + compiler headroom
    per_elem = 2 * C * L * (in_itemsize + out_itemsize)   # 2x = double-buffered
    budget = int(vmem_cap * 0.6)
    max_nb = max(1, (budget - fixed) // per_elem)

    divs = [d for d in range(1, N + 1) if N % d == 0 and d <= max_nb] or [1]
    # Prefer >= 2 grid steps (v7x needs >= 2 to use both TensorCores) and an
    # even step count for load balance; then take the largest fitting tile.
    multi = [d for d in divs if N // d >= 2]
    if multi:
        even = [d for d in multi if (N // d) % 2 == 0]
        pool = even if even else multi
    else:
        pool = divs
    nb = max(pool)

    needed = fixed + nb * per_elem
    limit = int(max(32 << 20, min(needed + (4 << 20), vmem_cap - (4 << 20))))
    return nb, limit


def residual_forward(x, params, *, matmul_dtype=jnp.bfloat16, split_k3_min_c=256):
    """Eval-mode forward of `residual`.

    params = 3 tuples (layer1 k=1, layer2 k=3, layer3 k=1 shortcut), each
    (weight (C, C, K), bias, gamma, beta, running_mean, running_var).

    matmul_dtype    : MXU operand dtype. bf16 (default) runs the MXU at full
                      rate on v5e/v6e/v7x with f32 accumulation; pass
                      jnp.float32 for exact parity with an f32 reference.
    split_k3_min_c  : channel count at which the k=3 conv switches from one
                      deep-K (C, 3C) matmul to three accumulated dots
                      (use 128 on v5e per its 128-wide MXU).
    HBM traffic: x / output keep whatever dtype they arrive in; feed bf16
    activations for half the DMA bytes if the surrounding model allows.
    """
    N, C, L = x.shape
    (w1, b1, g1, bt1, rm1, rv1), (w2, b2, g2, bt2, rm2, rv2), \
        (w3, b3, g3, bt3, rm3, rv3) = params

    def fold(w, b, g, bt, rm, rv):
        # Fold BatchNorm (eval, running stats) affine + conv bias into w / offset.
        scale = g * jax.lax.rsqrt(rv + EPS)                          # (C,)
        return w * scale[:, None, None], (b - rm) * scale + bt

    w1f, off1 = fold(w1, b1, g1, bt1, rm1, rv1)
    w2f, off2 = fold(w2, b2, g2, bt2, rm2, rv2)
    w3f, off3 = fold(w3, b3, g3, bt3, rm3, rv3)

    w1k = w1f[:, :, 0].astype(matmul_dtype)                                  # (C, C)
    w2k = jnp.concatenate([w2f[:, :, 0], w2f[:, :, 1], w2f[:, :, 2]],
                          axis=1).astype(matmul_dtype)                       # (C, 3C)
    w3k = w3f[:, :, 0].astype(matmul_dtype)                                  # (C, C)
    offs = jnp.stack([off1, off2, off3]).astype(jnp.float32)[:, :, None]     # (3, C, 1)

    # Padding masks for the l-1 / l+1 taps of the k=3 conv, built once here
    # (no per-step iota / mod / compare / select inside the kernel).
    pos = jnp.arange(L)
    masks = jnp.stack([(pos != 0), (pos != L - 1)]).astype(matmul_dtype)[:, None, :]  # (2, 1, L)

    in_sz = jnp.dtype(x.dtype).itemsize
    mm_sz = jnp.dtype(matmul_dtype).itemsize
    NB, vmem_limit = _pick_batch_tile(N, C, L, in_sz, in_sz, mm_sz,
                                      _vmem_capacity_bytes())
    split_k3 = C >= split_k3_min_c
    kernel = functools.partial(_residual_kernel, matmul_dtype, split_k3)

    def run(single_buffer_consts):
        def const_spec(shape):
            kwargs = {}
            if single_buffer_consts:
                kwargs["pipeline_mode"] = pl.Buffered(1)   # never re-fetched
            imap = (lambda g: (0, 0)) if len(shape) == 2 else (lambda g: (0, 0, 0))
            return pl.BlockSpec(shape, imap, **kwargs)

        return pl.pallas_call(
            kernel,
            out_shape=jax.ShapeDtypeStruct((N, C, L), x.dtype),
            grid_spec=pltpu.PrefetchScalarGridSpec(
                num_scalar_prefetch=0,
                grid=(N // NB,),
                in_specs=[
                    pl.BlockSpec((NB, C, L), lambda g: (g, 0, 0)),
                    const_spec((C, C)),
                    const_spec((C, 3 * C)),
                    const_spec((C, C)),
                    const_spec((3, C, 1)),
                    const_spec((2, 1, L)),
                ],
                out_specs=pl.BlockSpec((NB, C, L), lambda g: (g, 0, 0)),
            ),
            compiler_params=pltpu.CompilerParams(
                dimension_semantics=("parallel",),
                vmem_limit_bytes=vmem_limit),
        )(x, w1k, w2k, w3k, offs, masks)

    try:
        return run(True)
    except Exception:
        # pl.Buffered(1) not supported on this jax/libtpu: plain double-buffered
        # constant specs (correctness identical, slightly more VMEM).
        return run(False)


# ---------------- plain-JAX reference (for verification) ----------------
def _ref_block(x, w, b, g, bt, rm, rv, pad):
    N, C, L = x.shape
    K = w.shape[-1]
    xp = jnp.pad(x, ((0, 0), (0, 0), (pad, pad)))
    y = jnp.zeros((N, w.shape[0], L), jnp.float32)
    for k in range(K):
        y = y + jnp.einsum('oi,nil->nol', w[:, :, k], xp[:, :, k:k + L])
    y = y + b[None, :, None]
    y = (y - rm[None, :, None]) / jnp.sqrt(rv[None, :, None] + EPS) \
        * g[None, :, None] + bt[None, :, None]
    return y * jax.nn.sigmoid(y)


def _ref_residual(x, params):
    a = _ref_block(x, *params[0], pad=0)
    a = _ref_block(a, *params[1], pad=1)
    c = _ref_block(x, *params[2], pad=0)
    return a + c


def _make_params(key, C):
    def block(key, K):
        ks = jax.random.split(key, 6)
        w = jax.random.normal(ks[0], (C, C, K), jnp.float32) * 0.2
        b = jax.random.normal(ks[1], (C,), jnp.float32) * 0.1
        gamma = 1.0 + 0.1 * jax.random.normal(ks[2], (C,), jnp.float32)
        beta = 0.1 * jax.random.normal(ks[3], (C,), jnp.float32)
        rmean = 0.1 * jax.random.normal(ks[4], (C,), jnp.float32)
        rvar = 1.0 + 0.1 * jax.random.uniform(ks[5], (C,), jnp.float32)
        return (w, b, gamma, beta, rmean, rvar)

    k1, k2, k3 = jax.random.split(key, 3)
    return (block(k1, 1), block(k2, 3), block(k3, 1))


if __name__ == "__main__":
    N, C, L = 2, 8, 16          # batch, channels (in1), sequence length
    key = jax.random.PRNGKey(0)
    kx, kp = jax.random.split(key)
    x = jax.random.normal(kx, (N, C, L), jnp.float32)
    params = _make_params(kp, C)

    ref = jax.block_until_ready(_ref_residual(x, params))

    # Exact-parity path (f32 MXU operands).
    out_f32 = jax.block_until_ready(
        residual_forward(x, params, matmul_dtype=jnp.float32))
    assert out_f32.shape == (N, C, L)
    assert jnp.allclose(out_f32, ref, atol=1e-4, rtol=1e-4), "f32 mismatch"

    # Default fast path (bf16 MXU operands, f32 accumulation).
    out_bf16 = jax.block_until_ready(residual_forward(x, params))
    assert out_bf16.shape == (N, C, L)
    assert jnp.allclose(out_bf16, ref, atol=5e-2, rtol=5e-2), "bf16 mismatch"

    print("KERNEL_OK")
</pallas_src>

<mosaic_0001>
module attributes {stable_mosaic.version = 11 : i64} {
  func.func @_residual_kernel(%arg0: i32, %arg1: memref<1x8x16xf32, #tpu.memory_space<vmem>>, %arg2: memref<8x8xf32, #tpu.memory_space<vmem>>, %arg3: memref<8x24xf32, #tpu.memory_space<vmem>>, %arg4: memref<8x8xf32, #tpu.memory_space<vmem>>, %arg5: memref<3x8x1xf32, #tpu.memory_space<vmem>>, %arg6: memref<2x1x16xf32, #tpu.memory_space<vmem>>, %arg7: memref<1x8x16xf32, #tpu.memory_space<vmem>>) attributes {dimension_semantics = [#tpu.dimension_semantics<parallel>], iteration_bounds = array<i64: 2>, scalar_prefetch = 0 : i64, scratch_operands = 0 : i64, tpu.core_type = #tpu.core_type<tc>, window_params = [{transform_indices = @transform_0, window_bounds = array<i64: 1, 8, 16>}, {pipeline_mode = #tpu.pipeline_mode<synchronous>, transform_indices = @transform_1, window_bounds = array<i64: 8, 8>}, {pipeline_mode = #tpu.pipeline_mode<synchronous>, transform_indices = @transform_2, window_bounds = array<i64: 8, 24>}, {pipeline_mode = #tpu.pipeline_mode<synchronous>, transform_indices = @transform_3, window_bounds = array<i64: 8, 8>}, {pipeline_mode = #tpu.pipeline_mode<synchronous>, transform_indices = @transform_4, window_bounds = array<i64: 3, 8, 1>}, {pipeline_mode = #tpu.pipeline_mode<synchronous>, transform_indices = @transform_5, window_bounds = array<i64: 2, 1, 16>}, {transform_indices = @transform_6, window_bounds = array<i64: 1, 8, 16>}]} {
    %c0 = arith.constant 0 : index
    %c0_0 = arith.constant 0 : index
    %0 = vector.load %arg2[%c0, %c0_0] : memref<8x8xf32, #tpu.memory_space<vmem>>, vector<8x8xf32>
    %c0_1 = arith.constant 0 : index
    %c0_2 = arith.constant 0 : index
    %1 = vector.load %arg4[%c0_1, %c0_2] : memref<8x8xf32, #tpu.memory_space<vmem>>, vector<8x8xf32>
    %c0_3 = arith.constant 0 : index
    %c0_4 = arith.constant 0 : index
    %c0_5 = arith.constant 0 : index
    %2 = vector.load %arg5[%c0_3, %c0_4, %c0_5] : memref<3x8x1xf32, #tpu.memory_space<vmem>>, vector<1x8x1xf32>
    %3 = vector.shape_cast %2 : vector<1x8x1xf32> to vector<8x1xf32>
    %c1 = arith.constant 1 : index
    %c0_6 = arith.constant 0 : index
    %c0_7 = arith.constant 0 : index
    %4 = vector.load %arg5[%c1, %c0_6, %c0_7] : memref<3x8x1xf32, #tpu.memory_space<vmem>>, vector<1x8x1xf32>
    %5 = vector.shape_cast %4 : vector<1x8x1xf32> to vector<8x1xf32>
    %c2 = arith.constant 2 : index
    %c0_8 = arith.constant 0 : index
    %c0_9 = arith.constant 0 : index
    %6 = vector.load %arg5[%c2, %c0_8, %c0_9] : memref<3x8x1xf32, #tpu.memory_space<vmem>>, vector<1x8x1xf32>
    %7 = vector.shape_cast %6 : vector<1x8x1xf32> to vector<8x1xf32>
    %c0_10 = arith.constant 0 : index
    %c0_11 = arith.constant 0 : index
    %c0_12 = arith.constant 0 : index
    %8 = vector.load %arg6[%c0_10, %c0_11, %c0_12] : memref<2x1x16xf32, #tpu.memory_space<vmem>>, vector<1x1x16xf32>
    %9 = vector.shape_cast %8 : vector<1x1x16xf32> to vector<1x16xf32>
    %c1_13 = arith.constant 1 : index
    %c0_14 = arith.constant 0 : index
    %c0_15 = arith.constant 0 : index
    %10 = vector.load %arg6[%c1_13, %c0_14, %c0_15] : memref<2x1x16xf32, #tpu.memory_space<vmem>>, vector<1x1x16xf32>
    %11 = vector.shape_cast %10 : vector<1x1x16xf32> to vector<1x16xf32>
    %c0_16 = arith.constant 0 : index
    %c0_17 = arith.constant 0 : index
    %12 = vector.load %arg3[%c0_16, %c0_17] : memref<8x24xf32, #tpu.memory_space<vmem>>, vector<8x24xf32>
    %c0_18 = arith.constant 0 : index
    %c0_19 = arith.constant 0 : index
    %c0_20 = arith.constant 0 : index
    %13 = vector.load %arg1[%c0_18, %c0_19, %c0_20] : memref<1x8x16xf32, #tpu.memory_space<vmem>>, vector<1x8x16xf32>
    %14 = vector.shape_cast %13 : vector<1x8x16xf32> to vector<8x16xf32>
    %cst = arith.constant dense<0.000000e+00> : vector<8x16xf32>
    %15 = tpu.matmul %0, %14, %cst {dimension_numbers = #tpu.dot_dimension_numbers<[1], [0], [0], [1], [0, 0, 1, 1], [], []>} : vector<8x8xf32>, vector<8x16xf32>, vector<8x16xf32> -> vector<8x16xf32>
    %16 = vector.broadcast %3 : vector<8x1xf32> to vector<8x16xf32>
    %17 = arith.addf %15, %16 : vector<8x16xf32>
    %18 = arith.negf %17 : vector<8x16xf32>
    %19 = math.exp %18 : vector<8x16xf32>
    %cst_21 = arith.constant 1.000000e+00 : f32
    %20 = vector.broadcast %cst_21 : f32 to vector<8x16xf32>
    %21 = arith.addf %20, %19 : vector<8x16xf32>
    %22 = arith.divf %20, %21 : vector<8x16xf32>
    %23 = arith.mulf %17, %22 : vector<8x16xf32>
    %c1_i32 = arith.constant 1 : i32
    %24 = tpu.dynamic_rotate %23 by %c1_i32 dim 1 : vector<8x16xf32>, i32 -> vector<8x16xf32>
    %25 = vector.broadcast %9 : vector<1x16xf32> to vector<8x16xf32>
    %26 = arith.mulf %24, %25 : vector<8x16xf32>
    %c15_i32 = arith.constant 15 : i32
    %27 = tpu.dynamic_rotate %23 by %c15_i32 dim 1 : vector<8x16xf32>, i32 -> vector<8x16xf32>
    %28 = vector.broadcast %11 : vector<1x16xf32> to vector<8x16xf32>
    %29 = arith.mulf %27, %28 : vector<8x16xf32>
    %30 = tpu.concatenate %26, %23, %29 in 0 : vector<8x16xf32>, vector<8x16xf32>, vector<8x16xf32> -> vector<24x16xf32>
    %cst_22 = arith.constant dense<0.000000e+00> : vector<8x16xf32>
    %31 = tpu.matmul %12, %30, %cst_22 {dimension_numbers = #tpu.dot_dimension_numbers<[1], [0], [0], [1], [0, 0, 1, 1], [], []>} : vector<8x24xf32>, vector<24x16xf32>, vector<8x16xf32> -> vector<8x16xf32>
    %32 = vector.broadcast %5 : vector<8x1xf32> to vector<8x16xf32>
    %33 = arith.addf %31, %32 : vector<8x16xf32>
    %34 = arith.negf %33 : vector<8x16xf32>
    %35 = math.exp %34 : vector<8x16xf32>
    %cst_23 = arith.constant 1.000000e+00 : f32
    %36 = vector.broadcast %cst_23 : f32 to vector<8x16xf32>
    %37 = arith.addf %36, %35 : vector<8x16xf32>
    %38 = arith.divf %36, %37 : vector<8x16xf32>
    %39 = arith.mulf %33, %38 : vector<8x16xf32>
    %cst_24 = arith.constant dense<0.000000e+00> : vector<8x16xf32>
    %40 = tpu.matmul %1, %14, %cst_24 {dimension_numbers = #tpu.dot_dimension_numbers<[1], [0], [0], [1], [0, 0, 1, 1], [], []>} : vector<8x8xf32>, vector<8x16xf32>, vector<8x16xf32> -> vector<8x16xf32>
    %41 = vector.broadcast %7 : vector<8x1xf32> to vector<8x16xf32>
    %42 = arith.addf %40, %41 : vector<8x16xf32>
    %43 = arith.negf %42 : vector<8x16xf32>
    %44 = math.exp %43 : vector<8x16xf32>
    %cst_25 = arith.constant 1.000000e+00 : f32
    %45 = vector.broadcast %cst_25 : f32 to vector<8x16xf32>
    %46 = arith.addf %45, %44 : vector<8x16xf32>
    %47 = arith.divf %45, %46 : vector<8x16xf32>
    %48 = arith.mulf %42, %47 : vector<8x16xf32>
    %49 = arith.addf %39, %48 : vector<8x16xf32>
    %c0_26 = arith.constant 0 : index
    %c0_27 = arith.constant 0 : index
    %c0_28 = arith.constant 0 : index
    %50 = vector.load %arg7[%c0_26, %c0_27, %c0_28] : memref<1x8x16xf32, #tpu.memory_space<vmem>>, vector<1x8x16xf32>
    %51 = vector.shape_cast %50 : vector<1x8x16xf32> to vector<8x16xf32>
    %52 = vector.shape_cast %49 : vector<8x16xf32> to vector<1x8x16xf32>
    tpu.vector_store %arg7[%c0_26, %c0_27, %c0_28], %52 {strides = array<i32>} : memref<1x8x16xf32, #tpu.memory_space<vmem>>, vector<1x8x16xf32>,
    return
  }
  func.func @transform_0(%arg0: i32) -> (i32, i32, i32) {
    %c0_i32 = arith.constant 0 : i32
    %c0_i32_0 = arith.constant 0 : i32
    %c0_i32_1 = arith.constant 0 : i32
    return %arg0, %c0_i32, %c0_i32_0 : i32, i32, i32
  }
  func.func @transform_1(%arg0: i32) -> (i32, i32) {
    %c0_i32 = arith.constant 0 : i32
    %c0_i32_0 = arith.constant 0 : i32
    %c0_i32_1 = arith.constant 0 : i32
    return %c0_i32, %c0_i32_0 : i32, i32
  }
  func.func @transform_2(%arg0: i32) -> (i32, i32) {
    %c0_i32 = arith.constant 0 : i32
    %c0_i32_0 = arith.constant 0 : i32
    %c0_i32_1 = arith.constant 0 : i32
    return %c0_i32, %c0_i32_0 : i32, i32
  }
  func.func @transform_3(%arg0: i32) -> (i32, i32) {
    %c0_i32 = arith.constant 0 : i32
    %c0_i32_0 = arith.constant 0 : i32
    %c0_i32_1 = arith.constant 0 : i32
    return %c0_i32, %c0_i32_0 : i32, i32
  }
  func.func @transform_4(%arg0: i32) -> (i32, i32, i32) {
    %c0_i32 = arith.constant 0 : i32
    %c0_i32_0 = arith.constant 0 : i32
    %c0_i32_1 = arith.constant 0 : i32
    %c0_i32_2 = arith.constant 0 : i32
    return %c0_i32, %c0_i32_0, %c0_i32_1 : i32, i32, i32
  }
  func.func @transform_5(%arg0: i32) -> (i32, i32, i32) {
    %c0_i32 = arith.constant 0 : i32
    %c0_i32_0 = arith.constant 0 : i32
    %c0_i32_1 = arith.constant 0 : i32
    %c0_i32_2 = arith.constant 0 : i32
    return %c0_i32, %c0_i32_0, %c0_i32_1 : i32, i32, i32
  }
  func.func @transform_6(%arg0: i32) -> (i32, i32, i32) {
    %c0_i32 = arith.constant 0 : i32
    %c0_i32_0 = arith.constant 0 : i32
    %c0_i32_1 = arith.constant 0 : i32
    return %arg0, %c0_i32, %c0_i32_0 : i32, i32, i32
  }
}

module attributes {stable_mosaic.version = 11 : i64} {
  func.func @_residual_kernel(%arg0: i32, %arg1: memref<1x8x16xf32, #tpu.memory_space<vmem>>, %arg2: memref<8x8xf32, #tpu.memory_space<vmem>>, %arg3: memref<8x24xf32, #tpu.memory_space<vmem>>, %arg4: memref<8x8xf32, #tpu.memory_space<vmem>>, %arg5: memref<3x8x1xf32, #tpu.memory_space<vmem>>, %arg6: memref<2x1x16xf32, #tpu.memory_space<vmem>>, %arg7: memref<1x8x16xf32, #tpu.memory_space<vmem>>) attributes {dimension_semantics = [#tpu.dimension_semantics<parallel>], iteration_bounds = array<i64: 2>, scalar_prefetch = 0 : i64, scratch_operands = 0 : i64, tpu.core_type = #tpu.core_type<tc>, window_params = [{transform_indices = @transform_0, window_bounds = array<i64: 1, 8, 16>}, {pipeline_mode = #tpu.pipeline_mode<synchronous>, transform_indices = @transform_1, window_bounds = array<i64: 8, 8>}, {pipeline_mode = #tpu.pipeline_mode<synchronous>, transform_indices = @transform_2, window_bounds = array<i64: 8, 24>}, {pipeline_mode = #tpu.pipeline_mode<synchronous>, transform_indices = @transform_3, window_bounds = array<i64: 8, 8>}, {pipeline_mode = #tpu.pipeline_mode<synchronous>, transform_indices = @transform_4, window_bounds = array<i64: 3, 8, 1>}, {pipeline_mode = #tpu.pipeline_mode<synchronous>, transform_indices = @transform_5, window_bounds = array<i64: 2, 1, 16>}, {transform_indices = @transform_6, window_bounds = array<i64: 1, 8, 16>}]} {
    %c0 = arith.constant 0 : index
    %c0_0 = arith.constant 0 : index
    %0 = vector.load %arg2[%c0, %c0_0] : memref<8x8xf32, #tpu.memory_space<vmem>>, vector<8x8xf32>
    %c0_1 = arith.constant 0 : index
    %c0_2 = arith.constant 0 : index
    %1 = vector.load %arg4[%c0_1, %c0_2] : memref<8x8xf32, #tpu.memory_space<vmem>>, vector<8x8xf32>
    %c0_3 = arith.constant 0 : index
    %c0_4 = arith.constant 0 : index
    %c0_5 = arith.constant 0 : index
    %2 = vector.load %arg5[%c0_3, %c0_4, %c0_5] : memref<3x8x1xf32, #tpu.memory_space<vmem>>, vector<1x8x1xf32>
    %3 = vector.shape_cast %2 : vector<1x8x1xf32> to vector<8x1xf32>
    %c1 = arith.constant 1 : index
    %c0_6 = arith.constant 0 : index
    %c0_7 = arith.constant 0 : index
    %4 = vector.load %arg5[%c1, %c0_6, %c0_7] : memref<3x8x1xf32, #tpu.memory_space<vmem>>, vector<1x8x1xf32>
    %5 = vector.shape_cast %4 : vector<1x8x1xf32> to vector<8x1xf32>
    %c2 = arith.constant 2 : index
    %c0_8 = arith.constant 0 : index
    %c0_9 = arith.constant 0 : index
    %6 = vector.load %arg5[%c2, %c0_8, %c0_9] : memref<3x8x1xf32, #tpu.memory_space<vmem>>, vector<1x8x1xf32>
    %7 = vector.shape_cast %6 : vector<1x8x1xf32> to vector<8x1xf32>
    %c0_10 = arith.constant 0 : index
    %c0_11 = arith.constant 0 : index
    %c0_12 = arith.constant 0 : index
    %8 = vector.load %arg6[%c0_10, %c0_11, %c0_12] : memref<2x1x16xf32, #tpu.memory_space<vmem>>, vector<1x1x16xf32>
    %9 = vector.shape_cast %8 : vector<1x1x16xf32> to vector<1x16xf32>
    %c1_13 = arith.constant 1 : index
    %c0_14 = arith.constant 0 : index
    %c0_15 = arith.constant 0 : index
    %10 = vector.load %arg6[%c1_13, %c0_14, %c0_15] : memref<2x1x16xf32, #tpu.memory_space<vmem>>, vector<1x1x16xf32>
    %11 = vector.shape_cast %10 : vector<1x1x16xf32> to vector<1x16xf32>
    %c0_16 = arith.constant 0 : index
    %c0_17 = arith.constant 0 : index
    %12 = vector.load %arg3[%c0_16, %c0_17] : memref<8x24xf32, #tpu.memory_space<vmem>>, vector<8x24xf32>
    %c0_18 = arith.constant 0 : index
    %c0_19 = arith.constant 0 : index
    %c0_20 = arith.constant 0 : index
    %13 = vector.load %arg1[%c0_18, %c0_19, %c0_20] : memref<1x8x16xf32, #tpu.memory_space<vmem>>, vector<1x8x16xf32>
    %14 = vector.shape_cast %13 : vector<1x8x16xf32> to vector<8x16xf32>
    %cst = arith.constant dense<0.000000e+00> : vector<8x16xf32>
    %15 = tpu.matmul %0, %14, %cst {dimension_numbers = #tpu.dot_dimension_numbers<[1], [0], [0], [1], [0, 0, 1, 1], [], []>} : vector<8x8xf32>, vector<8x16xf32>, vector<8x16xf32> -> vector<8x16xf32>
    %16 = vector.broadcast %3 : vector<8x1xf32> to vector<8x16xf32>
    %17 = arith.addf %15, %16 : vector<8x16xf32>
    %18 = arith.negf %17 : vector<8x16xf32>
    %19 = math.exp %18 : vector<8x16xf32>
    %cst_21 = arith.constant 1.000000e+00 : f32
    %20 = vector.broadcast %cst_21 : f32 to vector<8x16xf32>
    %21 = arith.addf %20, %19 : vector<8x16xf32>
    %22 = arith.divf %20, %21 : vector<8x16xf32>
    %23 = arith.mulf %17, %22 : vector<8x16xf32>
    %c1_i32 = arith.constant 1 : i32
    %24 = tpu.dynamic_rotate %23 by %c1_i32 dim 1 : vector<8x16xf32>, i32 -> vector<8x16xf32>
    %25 = vector.broadcast %9 : vector<1x16xf32> to vector<8x16xf32>
    %26 = arith.mulf %24, %25 : vector<8x16xf32>
    %c15_i32 = arith.constant 15 : i32
    %27 = tpu.dynamic_rotate %23 by %c15_i32 dim 1 : vector<8x16xf32>, i32 -> vector<8x16xf32>
    %28 = vector.broadcast %11 : vector<1x16xf32> to vector<8x16xf32>
    %29 = arith.mulf %27, %28 : vector<8x16xf32>
    %30 = tpu.concatenate %26, %23, %29 in 0 : vector<8x16xf32>, vector<8x16xf32>, vector<8x16xf32> -> vector<24x16xf32>
    %cst_22 = arith.constant dense<0.000000e+00> : vector<8x16xf32>
    %31 = tpu.matmul %12, %30, %cst_22 {dimension_numbers = #tpu.dot_dimension_numbers<[1], [0], [0], [1], [0, 0, 1, 1], [], []>} : vector<8x24xf32>, vector<24x16xf32>, vector<8x16xf32> -> vector<8x16xf32>
    %32 = vector.broadcast %5 : vector<8x1xf32> to vector<8x16xf32>
    %33 = arith.addf %31, %32 : vector<8x16xf32>
    %34 = arith.negf %33 : vector<8x16xf32>
    %35 = math.exp %34 : vector<8x16xf32>
    %cst_23 = arith.constant 1.000000e+00 : f32
    %36 = vector.broadcast %cst_23 : f32 to vector<8x16xf32>
    %37 = arith.addf %36, %35 : vector<8x16xf32>
    %38 = arith.divf %36, %37 : vector<8x16xf32>
    %39 = arith.mulf %33, %38 : vector<8x16xf32>
    %cst_24 = arith.constant dense<0.000000e+00> : vector<8x16xf32>
    %40 = tpu.matmul %1, %14, %cst_24 {dimension_numbers = #tpu.dot_dimension_numbers<[1], [0], [0], [1], [0, 0, 1, 1], [], []>} : vector<8x8xf32>, vector<8x16xf32>, vector<8x16xf32> -> vector<8x16xf32>
    %41 = vector.broadcast %7 : vector<8x1xf32> to vector<8x16xf32>
    %42 = arith.addf %40, %41 : vector<8x16xf32>
    %43 = arith.negf %42 : vector<8x16xf32>
    %44 = math.exp %43 : vector<8x16xf32>
    %cst_25 = arith.constant 1.000000e+00 : f32
    %45 = vector.broadcast %cst_25 : f32 to vector<8x16xf32>
    %46 = arith.addf %45, %44 : vector<8x16xf32>
    %47 = arith.divf %45, %46 : vector<8x16xf32>
    %48 = arith.mulf %42, %47 : vector<8x16xf32>
    %49 = arith.addf %39, %48 : vector<8x16xf32>
    %c0_26 = arith.constant 0 : index
    %c0_27 = arith.constant 0 : index
    %c0_28 = arith.constant 0 : index
    %50 = vector.load %arg7[%c0_26, %c0_27, %c0_28] : memref<1x8x16xf32, #tpu.memory_space<vmem>>, vector<1x8x16xf32>
    %51 = vector.shape_cast %50 : vector<1x8x16xf32> to vector<8x16xf32>
    %52 = vector.shape_cast %49 : vector<8x16xf32> to vector<1x8x16xf32>
    tpu.vector_store %arg7[%c0_26, %c0_27, %c0_28], %52 {strides = array<i32>} : memref<1x8x16xf32, #tpu.memory_space<vmem>>, vector<1x8x16xf32>,
    return
  }
  func.func @transform_0(%arg0: i32) -> (i32, i32, i32) {
    %c0_i32 = arith.constant 0 : i32
    %c0_i32_0 = arith.constant 0 : i32
    %c0_i32_1 = arith.constant 0 : i32
    return %arg0, %c0_i32, %c0_i32_0 : i32, i32, i32
  }
  func.func @transform_1(%arg0: i32) -> (i32, i32) {
    %c0_i32 = arith.constant 0 : i32
    %c0_i32_0 = arith.constant 0 : i32
    %c0_i32_1 = arith.constant 0 : i32
    return %c0_i32, %c0_i32_0 : i32, i32
  }
  func.func @transform_2(%arg0: i32) -> (i32, i32) {
    %c0_i32 = arith.constant 0 : i32
    %c0_i32_0 = arith.constant 0 : i32
    %c0_i32_1 = arith.constant 0 : i32
    return %c0_i32, %c0_i32_0 : i32, i32
  }
  func.func @transform_3(%arg0: i32) -> (i32, i32) {
    %c0_i32 = arith.constant 0 : i32
    %c0_i32_0 = arith.constant 0 : i32
    %c0_i32_1 = arith.constant 0 : i32
    return %c0_i32, %c0_i32_0 : i32, i32
  }
  func.func @transform_4(%arg0: i32) -> (i32, i32, i32) {
    %c0_i32 = arith.constant 0 : i32
    %c0_i32_0 = arith.constant 0 : i32
    %c0_i32_1 = arith.constant 0 : i32
    %c0_i32_2 = arith.constant 0 : i32
    return %c0_i32, %c0_i32_0, %c0_i32_1 : i32, i32, i32
  }
  func.func @transform_5(%arg0: i32) -> (i32, i32, i32) {
    %c0_i32 = arith.constant 0 : i32
    %c0_i32_0 = arith.constant 0 : i32
    %c0_i32_1 = arith.constant 0 : i32
    %c0_i32_2 = arith.constant 0 : i32
    return %c0_i32, %c0_i32_0, %c0_i32_1 : i32, i32, i32
  }
  func.func @transform_6(%arg0: i32) -> (i32, i32, i32) {
    %c0_i32 = arith.constant 0 : i32
    %c0_i32_0 = arith.constant 0 : i32
    %c0_i32_1 = arith.constant 0 : i32
    return %arg0, %c0_i32, %c0_i32_0 : i32, i32, i32
  }
}

</mosaic_0001>

<llo_original>
// kernel: tpu_custom_call.1
$region0: #{tpu_custom_call.1}
  #allocation0 [shape = 'u32[]', space=smem, size = 0x4, offset = 0x4, fixed_abs, tag = 'smem constant byte address 0x4 - core index']
  #allocation1 [shape = 'u32[144,128]{1,0:T(1,128)}', space=vmem, size = 0x12000, scoped, tag = 'internal scratch']
  %s0 = inlined_call_operand.vmem [shape: f32[2,8,16], index: 0, kind: input, shape index: {}]
  %s1 = inlined_call_operand.vmem [shape: f32[8,8], index: 1, kind: input, shape index: {}]
  %s2 = inlined_call_operand.vmem [shape: f32[8,24], index: 2, kind: input, shape index: {}]
  %s3 = inlined_call_operand.hbm [shape: f32[8,8], index: 3, kind: input, shape index: {}]
  %s4 = inlined_call_operand.vmem [shape: f32[3,8,1], index: 4, kind: input, shape index: {}]
  %s5 = inlined_call_operand.vmem [shape: f32[2,1,16], index: 5, kind: input, shape index: {}]
  %s6 = inlined_call_operand.hbm [shape: f32[2,8,16], index: 6, kind: output, shape index: {}]
  %s7 = sld [smem:[#allocation0]]
  $region61: #{tpu_custom_call.1} parent=0
    _
  %s9 = ssub.s32 1, %s7
  %s10 = scalar_select 0, %s9, %s7
  $region1: #{tpu_custom_call.1} parent=0
    #allocation2 [shape = 'u8[4096]{0}', space=vmem, size = 0x1000, scoped, tag = 'input window, operand 3, single buffered']
    #allocation3 [shape = 's32[2]{0}', space=sflag, size = 0x8, scoped, tag = 'scoped memory for tpu_custom_call.1']
    #allocation4 [shape = 's32[2]{0}', space=sflag, size = 0x8, scoped, tag = 'scoped memory for tpu_custom_call.1']
    #allocation5 [shape = 'u8[8192]{0}', space=vmem, size = 0x2000, scoped, tag = 'output window, operand 0']
    %11 = vsyncpa [#allocation3], 0
    %12 = vsyncpa [#allocation4], 0
    %s13 = scalar_lea.sflag [#allocation4], 1
    %14 = vsyncpa %s13, 0
    loop: start=0, step=1, limit=4
    $region2: #{tpu_custom_call.1} parent=1 // loop_pre_header
      _
    $region3: #{tpu_custom_call.1} parent=1 // loop_header
      %s16 = sphi 0, %s20
      %p17 = scmp.ge.s32.totalorder %s16, 4
      %s26 = sphi 0, %s28
      %s29 = sphi 0, %s26
      %s30 = sphi 0, %s29
      %s46 = sphi 0, %s30
      %s50 = sphi 0, %s50
      %s52 = sphi 0, %s50
      %s53 = sphi 0, %s52
      %s67 = sphi 0, %s53
      %s71 = sphi 0, %s71
      %s73 = sphi 0, %s71
      %s74 = sphi 0, %s73
      %s88 = sphi 0, %s74
      %s92 = sphi 0, %s92
      %s94 = sphi 0, %s92
      %s95 = sphi 0, %s94
      %s109 = sphi 0, %s95
      %s113 = sphi 0, %s113
      %s115 = sphi 0, %s113
      %s116 = sphi 0, %s115
      %s130 = sphi 0, %s116
      %s134 = sphi 0, %s134
      %s136 = sphi 0, %s134
      %s137 = sphi 0, %s136
      %s151 = sphi 0, %s137
      %s157 = sphi 0, %s159
      %s160 = sphi 0, %s157
      %s161 = sphi 0, %s160
      %s177 = sphi 0, %s161
    $region4: #{tpu_custom_call.1} parent=1 // loop_header_branch
      %19 = sbr.rel (%p17) target = $region8
    $region5: #{tpu_custom_call.1} parent=1 // loop_body
      %s21 = ssub.s32 %s16, 1
      %s22 = ssub.s32 %s16, 2
      %s23 = sadd.s32 %s16, 1
      %s24 = ssub.s32 %s16, %s23
      %p25 = scmp.eq.s32.totalorder %s24, 0
      %s27 = sadd.s32 %s26, 1
      %s28 = scalar_select %p25, %s26, %s27
      %p31 = pneg %p25
      %p32 = scmp.eq.s32.totalorder %s16, 1
      %p33 = por %p31, %p32
      %p34 = scmp.ne.s32.totalorder %s26, %s29
      %p35 = scmp.eq.s32.totalorder %s16, 0
      %p36 = por %p34, %p35
      %p37 = scmp.ne.s32.totalorder %s26, %s29
      %p38 = scmp.eq.s32.totalorder %s21, 1
      %p39 = por %p37, %p38
      %p40 = scmp.ne.s32.totalorder %s29, %s30
      %p41 = scmp.eq.s32.totalorder %s21, 0
      %p42 = por %p40, %p41
      %p43 = scmp.ne.s32.totalorder %s29, %s30
      %p44 = scmp.eq.s32.totalorder %s22, 1
      %p45 = por %p43, %p44
      %p47 = scmp.ne.s32.totalorder %s30, %s46
      %p48 = scmp.eq.s32.totalorder %s22, 0
      %p49 = por %p47, %p48
      %s51 = sadd.s32 %s50, 1
      %p54 = scmp.eq.s32.totalorder %s16, 1
      %p55 = scmp.ne.s32.totalorder %s50, %s52
      %p56 = scmp.eq.s32.totalorder %s16, 0
      %p57 = por %p55, %p56
      %p58 = scmp.ne.s32.totalorder %s50, %s52
      %p59 = scmp.eq.s32.totalorder %s21, 1
      %p60 = por %p58, %p59
      %p61 = scmp.ne.s32.totalorder %s52, %s53
      %p62 = scmp.eq.s32.totalorder %s21, 0
      %p63 = por %p61, %p62
      %p64 = scmp.ne.s32.totalorder %s52, %s53
      %p65 = scmp.eq.s32.totalorder %s22, 1
      %p66 = por %p64, %p65
      %p68 = scmp.ne.s32.totalorder %s53, %s67
      %p69 = scmp.eq.s32.totalorder %s22, 0
      %p70 = por %p68, %p69
      %s72 = sadd.s32 %s71, 1
      %p75 = scmp.eq.s32.totalorder %s16, 1
      %p76 = scmp.ne.s32.totalorder %s71, %s73
      %p77 = scmp.eq.s32.totalorder %s16, 0
      %p78 = por %p76, %p77
      %p79 = scmp.ne.s32.totalorder %s71, %s73
      %p80 = scmp.eq.s32.totalorder %s21, 1
      %p81 = por %p79, %p80
      %p82 = scmp.ne.s32.totalorder %s73, %s74
      %p83 = scmp.eq.s32.totalorder %s21, 0
      %p84 = por %p82, %p83
      %p85 = scmp.ne.s32.totalorder %s73, %s74
      %p86 = scmp.eq.s32.totalorder %s22, 1
      %p87 = por %p85, %p86
      %p89 = scmp.ne.s32.totalorder %s74, %s88
      %p90 = scmp.eq.s32.totalorder %s22, 0
      %p91 = por %p89, %p90
      %s93 = sadd.s32 %s92, 1
      %p96 = scmp.eq.s32.totalorder %s16, 1
      %p97 = scmp.ne.s32.totalorder %s92, %s94
      %p98 = scmp.eq.s32.totalorder %s16, 0
      %p99 = por %p97, %p98
      %p100 = scmp.ne.s32.totalorder %s92, %s94
      %p101 = scmp.eq.s32.totalorder %s21, 1
      %p102 = por %p100, %p101
      %p103 = scmp.ne.s32.totalorder %s94, %s95
      %p104 = scmp.eq.s32.totalorder %s21, 0
      %p105 = por %p103, %p104
      %p106 = scmp.ne.s32.totalorder %s94, %s95
      %p107 = scmp.eq.s32.totalorder %s22, 1
      %p108 = por %p106, %p107
      %p110 = scmp.ne.s32.totalorder %s95, %s109
      %p111 = scmp.eq.s32.totalorder %s22, 0
      %p112 = por %p110, %p111
      %s114 = sadd.s32 %s113, 1
      %p117 = scmp.eq.s32.totalorder %s16, 1
      %p118 = scmp.ne.s32.totalorder %s113, %s115
      %p119 = scmp.eq.s32.totalorder %s16, 0
      %p120 = por %p118, %p119
      %p121 = scmp.ne.s32.totalorder %s113, %s115
      %p122 = scmp.eq.s32.totalorder %s21, 1
      %p123 = por %p121, %p122
      %p124 = scmp.ne.s32.totalorder %s115, %s116
      %p125 = scmp.eq.s32.totalorder %s21, 0
      %p126 = por %p124, %p125
      %p127 = scmp.ne.s32.totalorder %s115, %s116
      %p128 = scmp.eq.s32.totalorder %s22, 1
      %p129 = por %p127, %p128
      %p131 = scmp.ne.s32.totalorder %s116, %s130
      %p132 = scmp.eq.s32.totalorder %s22, 0
      %p133 = por %p131, %p132
      %s135 = sadd.s32 %s134, 1
      %p138 = scmp.eq.s32.totalorder %s16, 1
      %p139 = scmp.ne.s32.totalorder %s134, %s136
      %p140 = scmp.eq.s32.totalorder %s16, 0
      %p141 = por %p139, %p140
      %p142 = scmp.ne.s32.totalorder %s134, %s136
      %p143 = scmp.eq.s32.totalorder %s21, 1
      %p144 = por %p142, %p143
      %p145 = scmp.ne.s32.totalorder %s136, %s137
      %p146 = scmp.eq.s32.totalorder %s21, 0
      %p147 = por %p145, %p146
      %p148 = scmp.ne.s32.totalorder %s136, %s137
      %p149 = scmp.eq.s32.totalorder %s22, 1
      %p150 = por %p148, %p149
      %p152 = scmp.ne.s32.totalorder %s137, %s151
      %p153 = scmp.eq.s32.totalorder %s22, 0
      %p154 = por %p152, %p153
      %s155 = ssub.s32 %s16, %s23
      %p156 = scmp.eq.s32.totalorder %s155, 0
      %s158 = sadd.s32 %s157, 1
      %s159 = scalar_select %p156, %s157, %s158
      %p162 = pneg %p156
      %p163 = scmp.eq.s32.totalorder %s16, 1
      %p164 = por %p162, %p163
      %p165 = scmp.ne.s32.totalorder %s157, %s160
      %p166 = scmp.eq.s32.totalorder %s16, 0
      %p167 = por %p165, %p166
      %p168 = scmp.ne.s32.totalorder %s157, %s160
      %p169 = scmp.eq.s32.totalorder %s21, 1
      %p170 = por %p168, %p169
      %p171 = scmp.ne.s32.totalorder %s160, %s161
      %p172 = scmp.eq.s32.totalorder %s21, 0
      %p173 = por %p171, %p172
      %p174 = scmp.ne.s32.totalorder %s160, %s161
      %p175 = scmp.eq.s32.totalorder %s22, 1
      %p176 = por %p174, %p175
      %p178 = scmp.ne.s32.totalorder %s161, %s177
      %p179 = scmp.eq.s32.totalorder %s22, 0
      %p180 = por %p178, %p179
      %p181 = scmp.le.s32.totalorder 1, %s16
      %p182 = scmp.lt.s32.totalorder %s16, 3
      %p183 = pnand %p181, %p182
      %p184 = pneg %p183
      // Predicated region
      $region9: #{tpu_custom_call.1} parent=5 // pred_check
        _
      $region10: #{tpu_custom_call.1} parent=5 // pred_check_branch
        %186 = sbr.rel (%p183) target = $region12
      $region11: #{tpu_custom_call.1} parent=5 // pred_region
        %s187 = ssub.s32 %s16, 1
        // Predicated region
        $region13: #{tpu_custom_call.1} parent=11 // pred_check
          %p188 = pneg %p63
        $region14: #{tpu_custom_call.1} parent=11 // pred_check_branch
          %190 = sbr.rel (%p188) target = $region16
        $region15: #{tpu_custom_call.1} parent=11 // pred_region
          _
        $region16: #{tpu_custom_call.1} parent=11 // pred_fallthru
          _
        // Predicated region
        $region17: #{tpu_custom_call.1} parent=11 // pred_check
          %p191 = pneg %p84
        $region18: #{tpu_custom_call.1} parent=11 // pred_check_branch
          %193 = sbr.rel (%p191) target = $region20
        $region19: #{tpu_custom_call.1} parent=11 // pred_region
          _
        $region20: #{tpu_custom_call.1} parent=11 // pred_fallthru
          _
        // Predicated region
        $region21: #{tpu_custom_call.1} parent=11 // pred_check
          %p194 = pneg %p105
        $region22: #{tpu_custom_call.1} parent=11 // pred_check_branch
          %196 = sbr.rel (%p194) target = $region24
        $region23: #{tpu_custom_call.1} parent=11 // pred_region
          %s198 = ssub.s32 128, 128
          %199 = vsyncadd [#allocation3], %s198
          %s201 = sshll.u32 [#allocation2], 4
          %s202 = int_to_ptr.vmem [resolvable:$true] %s201
          %204 = dma.hbm_to_vmem [thread:$0]  %s3, 128, %s202, [#allocation3]
        $region24: #{tpu_custom_call.1} parent=11 // pred_fallthru
          _
        // Predicated region
        $region25: #{tpu_custom_call.1} parent=11 // pred_check
          %p205 = pneg %p126
        $region26: #{tpu_custom_call.1} parent=11 // pred_check_branch
          %207 = sbr.rel (%p205) target = $region28
        $region27: #{tpu_custom_call.1} parent=11 // pred_region
          _
        $region28: #{tpu_custom_call.1} parent=11 // pred_fallthru
          _
        // Predicated region
        $region29: #{tpu_custom_call.1} parent=11 // pred_check
          %p208 = pneg %p147
        $region30: #{tpu_custom_call.1} parent=11 // pred_check_branch
          %210 = sbr.rel (%p208) target = $region32
        $region31: #{tpu_custom_call.1} parent=11 // pred_region
          _
        $region32: #{tpu_custom_call.1} parent=11 // pred_fallthru
          _
      $region12: #{tpu_custom_call.1} parent=5 // pred_fallthru
        _
      %p211 = scmp.lt.s32.totalorder %s16, 2
      // Predicated region
      $region33: #{tpu_custom_call.1} parent=5 // pred_check
        %p212 = pneg %p211
      $region34: #{tpu_custom_call.1} parent=5 // pred_check_branch
        %214 = sbr.rel (%p212) target = $region36
      $region35: #{tpu_custom_call.1} parent=5 // pred_region
        // Predicated region
        $region37: #{tpu_custom_call.1} parent=35 // pred_check
          %p215 = pneg %p36
        $region38: #{tpu_custom_call.1} parent=35 // pred_check_branch
          %217 = sbr.rel (%p215) target = $region40
        $region39: #{tpu_custom_call.1} parent=35 // pred_region
          %p218 = scmp.lt.s32.totalorder %s16, 1
          %s219 = scalar_select %p218, %s16, 1
          %s220 = smul.addr %s219, 8
          %s221 = scalar_lea.vmem %s0, %s220
        $region40: #{tpu_custom_call.1} parent=35 // pred_fallthru
          _
      $region36: #{tpu_custom_call.1} parent=5 // pred_fallthru
        _
      %p222 = scmp.le.s32.totalorder 1, %s16
      %p223 = scmp.lt.s32.totalorder %s16, 3
      %p224 = pnand %p222, %p223
      %p225 = pneg %p224
      // Predicated region
      $region41: #{tpu_custom_call.1} parent=5 // pred_check
        _
      $region42: #{tpu_custom_call.1} parent=5 // pred_check_branch
        %227 = sbr.rel (%p224) target = $region44
      $region43: #{tpu_custom_call.1} parent=5 // pred_region
        %s228 = ssub.s32 %s16, 1
        // Predicated region
        $region45: #{tpu_custom_call.1} parent=43 // pred_check
          %p229 = pneg %p105
        $region46: #{tpu_custom_call.1} parent=43 // pred_check_branch
          %231 = sbr.rel (%p229) target = $region48
        $region47: #{tpu_custom_call.1} parent=43 // pred_region
          %232 = dma.done [#allocation3], 128
        $region48: #{tpu_custom_call.1} parent=43 // pred_fallthru
          _
        %p233 = scmp.lt.s32.totalorder %s21, 1
        %s234 = scalar_select %p233, %s21, 1
        %s235 = smul.addr %s234, 8
        %s236 = scalar_lea.vmem %s0, %s235
        %p237 = pneg %p42
        %p238 = pneg %p39
        %p239 = pneg %p63
        %p240 = pneg %p60
        %p241 = pneg %p84
        %p242 = pneg %p81
        %p243 = pneg %p105
        %p244 = pneg %p102
        %p245 = pneg %p126
        %p246 = pneg %p123
        %p247 = pneg %p147
        %p248 = pneg %p144
        %p249 = pneg %p173
        %p250 = pneg %p170
        %s251 = sand.u32 %s160, 1
        %s252 = scalar_lea.sflag [#allocation4], %s251
        %s253 = sand.u32 %s160, 1
        %s254 = smul.addr %s253, 8
        %s255 = scalar_lea.vmem [#allocation5], %s254
        %p256 = scmp.lt.s32.totalorder %s21, 1
        %s257 = scalar_select %p256, %s21, 1
        %s258 = smul.addr %s257, 8
        %s259 = scalar_lea.vmem %s0, %s258
        %v260 = vld [vmem:[%s1] sm:$0xff]
        %v261 = vld [vmem:[#allocation2] sm:$0xff]
        %v262 = vld [vmem:[%s4] sm:$0xff]
        %s263 = scalar_lea.vmem %s4, 8
        %v264 = vld [vmem:[%s263] sm:$0xff]
        %s265 = scalar_lea.vmem %s4, 16
        %v266 = vld [vmem:[%s265] sm:$0xff]
        %v267 = vld [vmem:[%s5] sm:$0x1]
        %s268 = scalar_lea.vmem %s5, 1
        %v269 = vld [vmem:[%s268] sm:$0x1]
        %v270 = vld [vmem:[%s2] sm:$0xff]
        %v271 = vld [vmem:[%s259] sm:$0xff]
        %273 = vset.pattern.permute.xlu0 0
        %274 = vperm.xlu0 %273, %v262
        %v275 = vpop.permute.xlu0 %274
        %vm277 = vcmask 64512
        %v279 = vsel %vm277, %v260, 0
        %281 = vmatprep.subr.mxu0 0.0
        %282 = vmatpush1.msra.mxu0 %v271
        %283 = vmatprep.subr.mxu0 0.0
        %284 = vmatpush1.msra.mxu0 0.0
        %285 = vmatprep.subr.mxu0 0.0
        %286 = vmatpush1.msra.mxu0 0.0
        %287 = vmatprep.subr.mxu0 0.0
        %288 = vmatpush1.msra.mxu0 0.0
        %289 = vmatprep.subr.mxu0 0.0
        %290 = vmatpush1.msra.mxu0 0.0
        %291 = vmatprep.subr.mxu0 0.0
        %292 = vmatpush1.msra.mxu0 0.0
        %293 = vmatprep.subr.mxu0 0.0
        %294 = vmatpush1.msra.mxu0 0.0
        %295 = vmatprep.subr.mxu0 0.0
        %296 = vmatpush1.msra.mxu0 0.0
        %297 = vmatprep.subr.mxu0 0.0
        %298 = vmatpush1.msra.mxu0 0.0
        %299 = vmatprep.subr.mxu0 0.0
        %300 = vmatpush1.msra.mxu0 0.0
        %301 = vmatprep.subr.mxu0 0.0
        %302 = vmatpush1.msra.mxu0 0.0
        %303 = vmatprep.subr.mxu0 0.0
        %304 = vmatpush1.msra.mxu0 0.0
        %305 = vmatprep.subr.mxu0 0.0
        %306 = vmatpush1.msra.mxu0 0.0
        %307 = vmatprep.subr.mxu0 0.0
        %308 = vmatpush1.msra.mxu0 0.0
        %309 = vmatprep.subr.mxu0 0.0
        %310 = vmatpush1.msra.mxu0 0.0
        %311 = vmatprep.subr.mxu0 0.0
        %312 = vmatpush1.msra.mxu0 0.0
        %313 = vmatprep.subr.mxu0 0.0
        %314 = vmatpush1.msra.mxu0 0.0
        %315 = vmatprep.subr.mxu0 0.0
        %316 = vmatpush1.msra.mxu0 0.0
        %317 = vmatprep.subr.mxu0 0.0
        %318 = vmatpush1.msra.mxu0 0.0
        %319 = vmatprep.subr.mxu0 0.0
        %320 = vmatpush1.msra.mxu0 0.0
        %321 = vmatprep.subr.mxu0 0.0
        %322 = vmatpush1.msra.mxu0 0.0
        %323 = vmatprep.subr.mxu0 0.0
        %324 = vmatpush1.msra.mxu0 0.0
        %325 = vmatprep.subr.mxu0 0.0
        %326 = vmatpush1.msra.mxu0 0.0
        %327 = vmatprep.subr.mxu0 0.0
        %328 = vmatpush1.msra.mxu0 0.0
        %329 = vmatprep.subr.mxu0 0.0
        %330 = vmatpush1.msra.mxu0 0.0
        %331 = vmatprep.subr.mxu0 0.0
        %332 = vmatpush1.msra.mxu0 0.0
        %333 = vmatprep.subr.mxu0 0.0
        %334 = vmatpush1.msra.mxu0 0.0
        %335 = vmatprep.subr.mxu0 0.0
        %336 = vmatpush1.msra.mxu0 0.0
        %337 = vmatprep.subr.mxu0 0.0
        %338 = vmatpush1.msra.mxu0 0.0
        %339 = vmatprep.subr.mxu0 0.0
        %340 = vmatpush1.msra.mxu0 0.0
        %341 = vmatprep.subr.mxu0 0.0
        %342 = vmatpush1.msra.mxu0 0.0
        %343 = vmatprep.subr.mxu0 0.0
        %344 = vmatpush1.msra.mxu0 0.0
        %345 = vmatprep.mubr.f32.mxu0 0.0
        %346 = vmatmul.mubr.f32.gmra.mrb[0].mxu0 %v279
        %v347 = vpop.f32.mrb[0].mxu0
        %v348 = vadd.f32 %v275, %v347
        %v349 = vpop.f32.mrb[0].mxu0
        %350 = vdwg.mxu0
        %v351 = vxor.u32 %v348, 2147483648
        %v352 = vmul.f32 %v351, 1.442695
        %v353 = vpow.pop %v352
        %v354 = vadd.f32 %v353, 1.0
        %v355 = vrcp.pop %v354
        %v356 = vmul.f32 1.0, %v355
        %v357 = vmul.f32 %v348, %v356
        %vm358 = vcmask 1047680
        %359 = vrot.lane.b32.xlu0 %v357, 16
        %v360 = vpop.permute.xlu0 %359
        %v361 = vsel %vm358, %v360, %v357
        %362 = vrot.lane.b32.xlu0 %v361, 16
        %v363 = vpop.permute.xlu0 %362
        %v364 = vsel %vm358, %v363, %v357
        %v366 = vlaneseq
        %v367 = vshrl.u32 %v366, 7
        %v368 = vsub.s32 0, %v367
        %v369 = vrot.slane %v267, %v368
        %370 = vrot.lane.b32.xlu0 %v369, 15
        %v371 = vpop.permute.xlu0 %370
        %v373 = vmul.f32 %v364, %v371
        %v375 = vlaneseq
        %v376 = vshrl.u32 %v375, 7
        %v377 = vsub.s32 0, %v376
        %v378 = vrot.slane %v269, %v377
        %379 = vrot.lane.b32.xlu0 %v378, 1
        %v380 = vpop.permute.xlu0 %379
        %v382 = vmul.f32 %v364, %v380
        %384 = vrot.lane.b32.xlu0 %v357, 15
        %v385 = vpop.permute.xlu0 %384
        %387 = vrot.lane.b32.xlu0 %v382, 14
        %v388 = vpop.permute.xlu0 %387
        %390 = vset.pattern.permute.xlu0 0
        %391 = vperm.xlu0 %390, %v264
        %v392 = vpop.permute.xlu0 %391
        %395 = vrot.lane.b32.xlu0 %v373, 113
        %v396 = vpop.permute.xlu0 %395
        %397 = vrot.lane.b32.xlu0 %v385, 113
        %v398 = vpop.permute.xlu0 %397
        %399 = vrot.lane.b32.xlu0 %v388, 113
        %v400 = vpop.permute.xlu0 %399
        %vm404 = vcmask 195584
        %v406 = vsel %vm404, %v270, 0
        %408 = vmatprep.subr.mxu0 0.0
        %409 = vmatpush1.msra.mxu0 %v396
        %410 = vmatprep.subr.mxu0 0.0
        %411 = vmatpush1.msra.mxu0 %v398
        %412 = vmatprep.subr.mxu0 0.0
        %413 = vmatpush1.msra.mxu0 %v400
        %414 = vmatprep.subr.mxu0 0.0
        %415 = vmatpush1.msra.mxu0 0.0
        %416 = vmatprep.subr.mxu0 0.0
        %417 = vmatpush1.msra.mxu0 0.0
        %418 = vmatprep.subr.mxu0 0.0
        %419 = vmatpush1.msra.mxu0 0.0
        %420 = vmatprep.subr.mxu0 0.0
        %421 = vmatpush1.msra.mxu0 0.0
        %422 = vmatprep.subr.mxu0 0.0
        %423 = vmatpush1.msra.mxu0 0.0
        %424 = vmatprep.subr.mxu0 0.0
        %425 = vmatpush1.msra.mxu0 0.0
        %426 = vmatprep.subr.mxu0 0.0
        %427 = vmatpush1.msra.mxu0 0.0
        %428 = vmatprep.subr.mxu0 0.0
        %429 = vmatpush1.msra.mxu0 0.0
        %430 = vmatprep.subr.mxu0 0.0
        %431 = vmatpush1.msra.mxu0 0.0
        %432 = vmatprep.subr.mxu0 0.0
        %433 = vmatpush1.msra.mxu0 0.0
        %434 = vmatprep.subr.mxu0 0.0
        %435 = vmatpush1.msra.mxu0 0.0
        %436 = vmatprep.subr.mxu0 0.0
        %437 = vmatpush1.msra.mxu0 0.0
        %438 = vmatprep.subr.mxu0 0.0
        %439 = vmatpush1.msra.mxu0 0.0
        %440 = vmatprep.subr.mxu0 0.0
        %441 = vmatpush1.msra.mxu0 0.0
        %442 = vmatprep.subr.mxu0 0.0
        %443 = vmatpush1.msra.mxu0 0.0
        %444 = vmatprep.subr.mxu0 0.0
        %445 = vmatpush1.msra.mxu0 0.0
        %446 = vmatprep.subr.mxu0 0.0
        %447 = vmatpush1.msra.mxu0 0.0
        %448 = vmatprep.subr.mxu0 0.0
        %449 = vmatpush1.msra.mxu0 0.0
        %450 = vmatprep.subr.mxu0 0.0
        %451 = vmatpush1.msra.mxu0 0.0
        %452 = vmatprep.subr.mxu0 0.0
        %453 = vmatpush1.msra.mxu0 0.0
        %454 = vmatprep.subr.mxu0 0.0
        %455 = vmatpush1.msra.mxu0 0.0
        %456 = vmatprep.subr.mxu0 0.0
        %457 = vmatpush1.msra.mxu0 0.0
        %458 = vmatprep.subr.mxu0 0.0
        %459 = vmatpush1.msra.mxu0 0.0
        %460 = vmatprep.subr.mxu0 0.0
        %461 = vmatpush1.msra.mxu0 0.0
        %462 = vmatprep.subr.mxu0 0.0
        %463 = vmatpush1.msra.mxu0 0.0
        %464 = vmatprep.subr.mxu0 0.0
        %465 = vmatpush1.msra.mxu0 0.0
        %466 = vmatprep.subr.mxu0 0.0
        %467 = vmatpush1.msra.mxu0 0.0
        %468 = vmatprep.subr.mxu0 0.0
        %469 = vmatpush1.msra.mxu0 0.0
        %470 = vmatprep.subr.mxu0 0.0
        %471 = vmatpush1.msra.mxu0 0.0
        %472 = vmatprep.mubr.f32.mxu0 0.0
        %473 = vmatmul.mubr.f32.gmra.mrb[0].mxu0 %v406
        %v474 = vpop.f32.mrb[0].mxu0
        %v475 = vadd.f32 %v392, %v474
        %v476 = vpop.f32.mrb[0].mxu0
        %477 = vdwg.mxu0
        %v478 = vxor.u32 %v475, 2147483648
        %v479 = vmul.f32 %v478, 1.442695
        %v480 = vpow.pop %v479
        %v481 = vadd.f32 %v480, 1.0
        %v482 = vrcp.pop %v481
        %v483 = vmul.f32 1.0, %v482
        %v484 = vmul.f32 %v475, %v483
        %486 = vset.pattern.permute.xlu0 0
        %487 = vperm.xlu0 %486, %v266
        %v488 = vpop.permute.xlu0 %487
        %v491 = vsel %vm277, %v261, 0
        %493 = vmatprep.subr.mxu0 0.0
        %494 = vmatpush1.msra.mxu0 %v271
        %495 = vmatprep.subr.mxu0 0.0
        %496 = vmatpush1.msra.mxu0 0.0
        %497 = vmatprep.subr.mxu0 0.0
        %498 = vmatpush1.msra.mxu0 0.0
        %499 = vmatprep.subr.mxu0 0.0
        %500 = vmatpush1.msra.mxu0 0.0
        %501 = vmatprep.subr.mxu0 0.0
        %502 = vmatpush1.msra.mxu0 0.0
        %503 = vmatprep.subr.mxu0 0.0
        %504 = vmatpush1.msra.mxu0 0.0
        %505 = vmatprep.subr.mxu0 0.0
        %506 = vmatpush1.msra.mxu0 0.0
        %507 = vmatprep.subr.mxu0 0.0
        %508 = vmatpush1.msra.mxu0 0.0
        %509 = vmatprep.subr.mxu0 0.0
        %510 = vmatpush1.msra.mxu0 0.0
        %511 = vmatprep.subr.mxu0 0.0
        %512 = vmatpush1.msra.mxu0 0.0
        %513 = vmatprep.subr.mxu0 0.0
        %514 = vmatpush1.msra.mxu0 0.0
        %515 = vmatprep.subr.mxu0 0.0
        %516 = vmatpush1.msra.mxu0 0.0
        %517 = vmatprep.subr.mxu0 0.0
        %518 = vmatpush1.msra.mxu0 0.0
        %519 = vmatprep.subr.mxu0 0.0
        %520 = vmatpush1.msra.mxu0 0.0
        %521 = vmatprep.subr.mxu0 0.0
        %522 = vmatpush1.msra.mxu0 0.0
        %523 = vmatprep.subr.mxu0 0.0
        %524 = vmatpush1.msra.mxu0 0.0
        %525 = vmatprep.subr.mxu0 0.0
        %526 = vmatpush1.msra.mxu0 0.0
        %527 = vmatprep.subr.mxu0 0.0
        %528 = vmatpush1.msra.mxu0 0.0
        %529 = vmatprep.subr.mxu0 0.0
        %530 = vmatpush1.msra.mxu0 0.0
        %531 = vmatprep.subr.mxu0 0.0
        %532 = vmatpush1.msra.mxu0 0.0
        %533 = vmatprep.subr.mxu0 0.0
        %534 = vmatpush1.msra.mxu0 0.0
        %535 = vmatprep.subr.mxu0 0.0
        %536 = vmatpush1.msra.mxu0 0.0
        %537 = vmatprep.subr.mxu0 0.0
        %538 = vmatpush1.msra.mxu0 0.0
        %539 = vmatprep.subr.mxu0 0.0
        %540 = vmatpush1.msra.mxu0 0.0
        %541 = vmatprep.subr.mxu0 0.0
        %542 = vmatpush1.msra.mxu0 0.0
        %543 = vmatprep.subr.mxu0 0.0
        %544 = vmatpush1.msra.mxu0 0.0
        %545 = vmatprep.subr.mxu0 0.0
        %546 = vmatpush1.msra.mxu0 0.0
        %547 = vmatprep.subr.mxu0 0.0
        %548 = vmatpush1.msra.mxu0 0.0
        %549 = vmatprep.subr.mxu0 0.0
        %550 = vmatpush1.msra.mxu0 0.0
        %551 = vmatprep.subr.mxu0 0.0
        %552 = vmatpush1.msra.mxu0 0.0
        %553 = vmatprep.subr.mxu0 0.0
        %554 = vmatpush1.msra.mxu0 0.0
        %555 = vmatprep.subr.mxu0 0.0
        %556 = vmatpush1.msra.mxu0 0.0
        %557 = vmatprep.mubr.f32.mxu0 0.0
        %558 = vmatmul.mubr.f32.gmra.mrb[0].mxu0 %v491
        %v559 = vpop.f32.mrb[0].mxu0
        %v560 = vadd.f32 %v488, %v559
        %v561 = vpop.f32.mrb[0].mxu0
        %562 = vdwg.mxu0
        %v563 = vxor.u32 %v560, 2147483648
        %v564 = vmul.f32 %v563, 1.442695
        %v565 = vpow.pop %v564
        %v566 = vadd.f32 %v565, 1.0
        %v567 = vrcp.pop %v566
        %v568 = vmul.f32 1.0, %v567
        %v569 = vmul.f32 %v560, %v568
        %v570 = vadd.f32 %v484, %v569
        %vm571 = vcmask 130048
        %572 = vst.msk [vmem:[%s255] sm:$0xff] %vm571, %v570
        %s573 = sand.u32 %s160, 1
        %s574 = scalar_lea.sflag [#allocation4], %s573
        %s575 = sand.u32 %s160, 1
        %s576 = smul.addr %s575, 8
        %s577 = scalar_lea.vmem [#allocation5], %s576
        // Predicated region
        $region49: #{tpu_custom_call.1} parent=43 // pred_check
          %p578 = pneg %p170
        $region50: #{tpu_custom_call.1} parent=43 // pred_check_branch
          %580 = sbr.rel (%p578) target = $region52
        $region51: #{tpu_custom_call.1} parent=43 // pred_region
          %s582 = ssub.s32 128, 128
          %583 = vsyncadd %s574, %s582
          %s584 = smul.addr %s21, 128
          %s585 = scalar_lea.hbm %s6, %s584
          %s587 = sshll.u32 %s577, 4
          %s588 = int_to_ptr.vmem [resolvable:$true] %s587
          %590 = dma.vmem_to_hbm [thread:$0]  %s588, 128, %s585, %s574
        $region52: #{tpu_custom_call.1} parent=43 // pred_fallthru
          _
      $region44: #{tpu_custom_call.1} parent=5 // pred_fallthru
        _
      %p591 = scmp.le.s32.totalorder 2, %s16
      // Predicated region
      $region53: #{tpu_custom_call.1} parent=5 // pred_check
        %p592 = pneg %p591
      $region54: #{tpu_custom_call.1} parent=5 // pred_check_branch
        %594 = sbr.rel (%p592) target = $region56
      $region55: #{tpu_custom_call.1} parent=5 // pred_region
        %s595 = ssub.s32 %s16, 2
        // Predicated region
        $region57: #{tpu_custom_call.1} parent=55 // pred_check
          %p596 = pneg %p176
        $region58: #{tpu_custom_call.1} parent=55 // pred_check_branch
          %598 = sbr.rel (%p596) target = $region60
        $region59: #{tpu_custom_call.1} parent=55 // pred_region
          %s599 = sand.u32 %s161, 1
          %s600 = scalar_lea.sflag [#allocation4], %s599
          %s601 = sand.u32 %s161, 1
          %s602 = smul.addr %s601, 8
          %s603 = scalar_lea.vmem [#allocation5], %s602
          %604 = dma.done %s600, 128
        $region60: #{tpu_custom_call.1} parent=55 // pred_fallthru
          _
      $region56: #{tpu_custom_call.1} parent=5 // pred_fallthru
        _
    $region6: #{tpu_custom_call.1} parent=1 // loop_footer
      %s20 = sadd.s32 1, %s16
    $region7: #{tpu_custom_call.1} parent=1 // loop_footer_branch
      %15 = sbr.rel target = $region3
    $region8: #{tpu_custom_call.1} parent=1 // loop_exit
      _
    %605 = vsyncpa [#allocation3], 1
    %s606 = scalar_lea.sflag [#allocation3], 1
    %607 = vsyncpa %s606, 1
    %608 = vsyncpa [#allocation4], 1
    %s609 = scalar_lea.sflag [#allocation4], 1
    %610 = vsyncpa %s609, 1

// kernel: tpu_custom_call.1
$region0: #{tpu_custom_call.1}
  #allocation0 [shape = 'u32[]', space=smem, size = 0x4, offset = 0x4, fixed_abs, tag = 'smem constant byte address 0x4 - core index']
  #allocation1 [shape = 'u32[144,128]{1,0:T(1,128)}', space=vmem, size = 0x12000, scoped, tag = 'internal scratch']
  %s0 = inlined_call_operand.vmem [shape: f32[2,8,16], index: 0, kind: input, shape index: {}]
  %s1 = inlined_call_operand.vmem [shape: f32[8,8], index: 1, kind: input, shape index: {}]
  %s2 = inlined_call_operand.vmem [shape: f32[8,24], index: 2, kind: input, shape index: {}]
  %s3 = inlined_call_operand.hbm [shape: f32[8,8], index: 3, kind: input, shape index: {}]
  %s4 = inlined_call_operand.vmem [shape: f32[3,8,1], index: 4, kind: input, shape index: {}]
  %s5 = inlined_call_operand.vmem [shape: f32[2,1,16], index: 5, kind: input, shape index: {}]
  %s6 = inlined_call_operand.hbm [shape: f32[2,8,16], index: 6, kind: output, shape index: {}]
  %s7 = sld [smem:[#allocation0]]
  $region61: #{tpu_custom_call.1} parent=0
    _
  %s9 = ssub.s32 1, %s7
  %s10 = scalar_select 0, %s9, %s7
  $region1: #{tpu_custom_call.1} parent=0
    #allocation2 [shape = 'u8[4096]{0}', space=vmem, size = 0x1000, scoped, tag = 'input window, operand 3, single buffered']
    #allocation3 [shape = 's32[2]{0}', space=sflag, size = 0x8, scoped, tag = 'scoped memory for tpu_custom_call.1']
    #allocation4 [shape = 's32[2]{0}', space=sflag, size = 0x8, scoped, tag = 'scoped memory for tpu_custom_call.1']
    #allocation5 [shape = 'u8[8192]{0}', space=vmem, size = 0x2000, scoped, tag = 'output window, operand 0']
    %11 = vsyncpa [#allocation3], 0
    %12 = vsyncpa [#allocation4], 0
    %s13 = scalar_lea.sflag [#allocation4], 1
    %14 = vsyncpa %s13, 0
    loop: start=0, step=1, limit=4
    $region2: #{tpu_custom_call.1} parent=1 // loop_pre_header
      _
    $region3: #{tpu_custom_call.1} parent=1 // loop_header
      %s16 = sphi 0, %s20
      %p17 = scmp.ge.s32.totalorder %s16, 4
      %s26 = sphi 0, %s28
      %s29 = sphi 0, %s26
      %s30 = sphi 0, %s29
      %s46 = sphi 0, %s30
      %s50 = sphi 0, %s50
      %s52 = sphi 0, %s50
      %s53 = sphi 0, %s52
      %s67 = sphi 0, %s53
      %s71 = sphi 0, %s71
      %s73 = sphi 0, %s71
      %s74 = sphi 0, %s73
      %s88 = sphi 0, %s74
      %s92 = sphi 0, %s92
      %s94 = sphi 0, %s92
      %s95 = sphi 0, %s94
      %s109 = sphi 0, %s95
      %s113 = sphi 0, %s113
      %s115 = sphi 0, %s113
      %s116 = sphi 0, %s115
      %s130 = sphi 0, %s116
      %s134 = sphi 0, %s134
      %s136 = sphi 0, %s134
      %s137 = sphi 0, %s136
      %s151 = sphi 0, %s137
      %s157 = sphi 0, %s159
      %s160 = sphi 0, %s157
      %s161 = sphi 0, %s160
      %s177 = sphi 0, %s161
    $region4: #{tpu_custom_call.1} parent=1 // loop_header_branch
      %19 = sbr.rel (%p17) target = $region8
    $region5: #{tpu_custom_call.1} parent=1 // loop_body
      %s21 = ssub.s32 %s16, 1
      %s22 = ssub.s32 %s16, 2
      %s23 = sadd.s32 %s16, 1
      %s24 = ssub.s32 %s16, %s23
      %p25 = scmp.eq.s32.totalorder %s24, 0
      %s27 = sadd.s32 %s26, 1
      %s28 = scalar_select %p25, %s26, %s27
      %p31 = pneg %p25
      %p32 = scmp.eq.s32.totalorder %s16, 1
      %p33 = por %p31, %p32
      %p34 = scmp.ne.s32.totalorder %s26, %s29
      %p35 = scmp.eq.s32.totalorder %s16, 0
      %p36 = por %p34, %p35
      %p37 = scmp.ne.s32.totalorder %s26, %s29
      %p38 = scmp.eq.s32.totalorder %s21, 1
      %p39 = por %p37, %p38
      %p40 = scmp.ne.s32.totalorder %s29, %s30
      %p41 = scmp.eq.s32.totalorder %s21, 0
      %p42 = por %p40, %p41
      %p43 = scmp.ne.s32.totalorder %s29, %s30
      %p44 = scmp.eq.s32.totalorder %s22, 1
      %p45 = por %p43, %p44
      %p47 = scmp.ne.s32.totalorder %s30, %s46
      %p48 = scmp.eq.s32.totalorder %s22, 0
      %p49 = por %p47, %p48
      %s51 = sadd.s32 %s50, 1
      %p54 = scmp.eq.s32.totalorder %s16, 1
      %p55 = scmp.ne.s32.totalorder %s50, %s52
      %p56 = scmp.eq.s32.totalorder %s16, 0
      %p57 = por %p55, %p56
      %p58 = scmp.ne.s32.totalorder %s50, %s52
      %p59 = scmp.eq.s32.totalorder %s21, 1
      %p60 = por %p58, %p59
      %p61 = scmp.ne.s32.totalorder %s52, %s53
      %p62 = scmp.eq.s32.totalorder %s21, 0
      %p63 = por %p61, %p62
      %p64 = scmp.ne.s32.totalorder %s52, %s53
      %p65 = scmp.eq.s32.totalorder %s22, 1
      %p66 = por %p64, %p65
      %p68 = scmp.ne.s32.totalorder %s53, %s67
      %p69 = scmp.eq.s32.totalorder %s22, 0
      %p70 = por %p68, %p69
      %s72 = sadd.s32 %s71, 1
      %p75 = scmp.eq.s32.totalorder %s16, 1
      %p76 = scmp.ne.s32.totalorder %s71, %s73
      %p77 = scmp.eq.s32.totalorder %s16, 0
      %p78 = por %p76, %p77
      %p79 = scmp.ne.s32.totalorder %s71, %s73
      %p80 = scmp.eq.s32.totalorder %s21, 1
      %p81 = por %p79, %p80
      %p82 = scmp.ne.s32.totalorder %s73, %s74
      %p83 = scmp.eq.s32.totalorder %s21, 0
      %p84 = por %p82, %p83
      %p85 = scmp.ne.s32.totalorder %s73, %s74
      %p86 = scmp.eq.s32.totalorder %s22, 1
      %p87 = por %p85, %p86
      %p89 = scmp.ne.s32.totalorder %s74, %s88
      %p90 = scmp.eq.s32.totalorder %s22, 0
      %p91 = por %p89, %p90
      %s93 = sadd.s32 %s92, 1
      %p96 = scmp.eq.s32.totalorder %s16, 1
      %p97 = scmp.ne.s32.totalorder %s92, %s94
      %p98 = scmp.eq.s32.totalorder %s16, 0
      %p99 = por %p97, %p98
      %p100 = scmp.ne.s32.totalorder %s92, %s94
      %p101 = scmp.eq.s32.totalorder %s21, 1
      %p102 = por %p100, %p101
      %p103 = scmp.ne.s32.totalorder %s94, %s95
      %p104 = scmp.eq.s32.totalorder %s21, 0
      %p105 = por %p103, %p104
      %p106 = scmp.ne.s32.totalorder %s94, %s95
      %p107 = scmp.eq.s32.totalorder %s22, 1
      %p108 = por %p106, %p107
      %p110 = scmp.ne.s32.totalorder %s95, %s109
      %p111 = scmp.eq.s32.totalorder %s22, 0
      %p112 = por %p110, %p111
      %s114 = sadd.s32 %s113, 1
      %p117 = scmp.eq.s32.totalorder %s16, 1
      %p118 = scmp.ne.s32.totalorder %s113, %s115
      %p119 = scmp.eq.s32.totalorder %s16, 0
      %p120 = por %p118, %p119
      %p121 = scmp.ne.s32.totalorder %s113, %s115
      %p122 = scmp.eq.s32.totalorder %s21, 1
      %p123 = por %p121, %p122
      %p124 = scmp.ne.s32.totalorder %s115, %s116
      %p125 = scmp.eq.s32.totalorder %s21, 0
      %p126 = por %p124, %p125
      %p127 = scmp.ne.s32.totalorder %s115, %s116
      %p128 = scmp.eq.s32.totalorder %s22, 1
      %p129 = por %p127, %p128
      %p131 = scmp.ne.s32.totalorder %s116, %s130
      %p132 = scmp.eq.s32.totalorder %s22, 0
      %p133 = por %p131, %p132
      %s135 = sadd.s32 %s134, 1
      %p138 = scmp.eq.s32.totalorder %s16, 1
      %p139 = scmp.ne.s32.totalorder %s134, %s136
      %p140 = scmp.eq.s32.totalorder %s16, 0
      %p141 = por %p139, %p140
      %p142 = scmp.ne.s32.totalorder %s134, %s136
      %p143 = scmp.eq.s32.totalorder %s21, 1
      %p144 = por %p142, %p143
      %p145 = scmp.ne.s32.totalorder %s136, %s137
      %p146 = scmp.eq.s32.totalorder %s21, 0
      %p147 = por %p145, %p146
      %p148 = scmp.ne.s32.totalorder %s136, %s137
      %p149 = scmp.eq.s32.totalorder %s22, 1
      %p150 = por %p148, %p149
      %p152 = scmp.ne.s32.totalorder %s137, %s151
      %p153 = scmp.eq.s32.totalorder %s22, 0
      %p154 = por %p152, %p153
      %s155 = ssub.s32 %s16, %s23
      %p156 = scmp.eq.s32.totalorder %s155, 0
      %s158 = sadd.s32 %s157, 1
      %s159 = scalar_select %p156, %s157, %s158
      %p162 = pneg %p156
      %p163 = scmp.eq.s32.totalorder %s16, 1
      %p164 = por %p162, %p163
      %p165 = scmp.ne.s32.totalorder %s157, %s160
      %p166 = scmp.eq.s32.totalorder %s16, 0
      %p167 = por %p165, %p166
      %p168 = scmp.ne.s32.totalorder %s157, %s160
      %p169 = scmp.eq.s32.totalorder %s21, 1
      %p170 = por %p168, %p169
      %p171 = scmp.ne.s32.totalorder %s160, %s161
      %p172 = scmp.eq.s32.totalorder %s21, 0
      %p173 = por %p171, %p172
      %p174 = scmp.ne.s32.totalorder %s160, %s161
      %p175 = scmp.eq.s32.totalorder %s22, 1
      %p176 = por %p174, %p175
      %p178 = scmp.ne.s32.totalorder %s161, %s177
      %p179 = scmp.eq.s32.totalorder %s22, 0
      %p180 = por %p178, %p179
      %p181 = scmp.le.s32.totalorder 1, %s16
      %p182 = scmp.lt.s32.totalorder %s16, 3
      %p183 = pnand %p181, %p182
      %p184 = pneg %p183
      // Predicated region
      $region9: #{tpu_custom_call.1} parent=5 // pred_check
        _
      $region10: #{tpu_custom_call.1} parent=5 // pred_check_branch
        %186 = sbr.rel (%p183) target = $region12
      $region11: #{tpu_custom_call.1} parent=5 // pred_region
        %s187 = ssub.s32 %s16, 1
        // Predicated region
        $region13: #{tpu_custom_call.1} parent=11 // pred_check
          %p188 = pneg %p63
        $region14: #{tpu_custom_call.1} parent=11 // pred_check_branch
          %190 = sbr.rel (%p188) target = $region16
        $region15: #{tpu_custom_call.1} parent=11 // pred_region
          _
        $region16: #{tpu_custom_call.1} parent=11 // pred_fallthru
          _
        // Predicated region
        $region17: #{tpu_custom_call.1} parent=11 // pred_check
          %p191 = pneg %p84
        $region18: #{tpu_custom_call.1} parent=11 // pred_check_branch
          %193 = sbr.rel (%p191) target = $region20
        $region19: #{tpu_custom_call.1} parent=11 // pred_region
          _
        $region20: #{tpu_custom_call.1} parent=11 // pred_fallthru
          _
        // Predicated region
        $region21: #{tpu_custom_call.1} parent=11 // pred_check
          %p194 = pneg %p105
        $region22: #{tpu_custom_call.1} parent=11 // pred_check_branch
          %196 = sbr.rel (%p194) target = $region24
        $region23: #{tpu_custom_call.1} parent=11 // pred_region
          %s198 = ssub.s32 128, 128
          %199 = vsyncadd [#allocation3], %s198
          %s201 = sshll.u32 [#allocation2], 4
          %s202 = int_to_ptr.vmem [resolvable:$true] %s201
          %204 = dma.hbm_to_vmem [thread:$0]  %s3, 128, %s202, [#allocation3]
        $region24: #{tpu_custom_call.1} parent=11 // pred_fallthru
          _
        // Predicated region
        $region25: #{tpu_custom_call.1} parent=11 // pred_check
          %p205 = pneg %p126
        $region26: #{tpu_custom_call.1} parent=11 // pred_check_branch
          %207 = sbr.rel (%p205) target = $region28
        $region27: #{tpu_custom_call.1} parent=11 // pred_region
          _
        $region28: #{tpu_custom_call.1} parent=11 // pred_fallthru
          _
        // Predicated region
        $region29: #{tpu_custom_call.1} parent=11 // pred_check
          %p208 = pneg %p147
        $region30: #{tpu_custom_call.1} parent=11 // pred_check_branch
          %210 = sbr.rel (%p208) target = $region32
        $region31: #{tpu_custom_call.1} parent=11 // pred_region
          _
        $region32: #{tpu_custom_call.1} parent=11 // pred_fallthru
          _
      $region12: #{tpu_custom_call.1} parent=5 // pred_fallthru
        _
      %p211 = scmp.lt.s32.totalorder %s16, 2
      // Predicated region
      $region33: #{tpu_custom_call.1} parent=5 // pred_check
        %p212 = pneg %p211
      $region34: #{tpu_custom_call.1} parent=5 // pred_check_branch
        %214 = sbr.rel (%p212) target = $region36
      $region35: #{tpu_custom_call.1} parent=5 // pred_region
        // Predicated region
        $region37: #{tpu_custom_call.1} parent=35 // pred_check
          %p215 = pneg %p36
        $region38: #{tpu_custom_call.1} parent=35 // pred_check_branch
          %217 = sbr.rel (%p215) target = $region40
        $region39: #{tpu_custom_call.1} parent=35 // pred_region
          %p218 = scmp.lt.s32.totalorder %s16, 1
          %s219 = scalar_select %p218, %s16, 1
          %s220 = smul.addr %s219, 8
          %s221 = scalar_lea.vmem %s0, %s220
        $region40: #{tpu_custom_call.1} parent=35 // pred_fallthru
          _
      $region36: #{tpu_custom_call.1} parent=5 // pred_fallthru
        _
      %p222 = scmp.le.s32.totalorder 1, %s16
      %p223 = scmp.lt.s32.totalorder %s16, 3
      %p224 = pnand %p222, %p223
      %p225 = pneg %p224
      // Predicated region
      $region41: #{tpu_custom_call.1} parent=5 // pred_check
        _
      $region42: #{tpu_custom_call.1} parent=5 // pred_check_branch
        %227 = sbr.rel (%p224) target = $region44
      $region43: #{tpu_custom_call.1} parent=5 // pred_region
        %s228 = ssub.s32 %s16, 1
        // Predicated region
        $region45: #{tpu_custom_call.1} parent=43 // pred_check
          %p229 = pneg %p105
        $region46: #{tpu_custom_call.1} parent=43 // pred_check_branch
          %231 = sbr.rel (%p229) target = $region48
        $region47: #{tpu_custom_call.1} parent=43 // pred_region
          %232 = dma.done [#allocation3], 128
        $region48: #{tpu_custom_call.1} parent=43 // pred_fallthru
          _
        %p233 = scmp.lt.s32.totalorder %s21, 1
        %s234 = scalar_select %p233, %s21, 1
        %s235 = smul.addr %s234, 8
        %s236 = scalar_lea.vmem %s0, %s235
        %p237 = pneg %p42
        %p238 = pneg %p39
        %p239 = pneg %p63
        %p240 = pneg %p60
        %p241 = pneg %p84
        %p242 = pneg %p81
        %p243 = pneg %p105
        %p244 = pneg %p102
        %p245 = pneg %p126
        %p246 = pneg %p123
        %p247 = pneg %p147
        %p248 = pneg %p144
        %p249 = pneg %p173
        %p250 = pneg %p170
        %s251 = sand.u32 %s160, 1
        %s252 = scalar_lea.sflag [#allocation4], %s251
        %s253 = sand.u32 %s160, 1
        %s254 = smul.addr %s253, 8
        %s255 = scalar_lea.vmem [#allocation5], %s254
        %p256 = scmp.lt.s32.totalorder %s21, 1
        %s257 = scalar_select %p256, %s21, 1
        %s258 = smul.addr %s257, 8
        %s259 = scalar_lea.vmem %s0, %s258
        %v260 = vld [vmem:[%s1] sm:$0xff]
        %v261 = vld [vmem:[#allocation2] sm:$0xff]
        %v262 = vld [vmem:[%s4] sm:$0xff]
        %s263 = scalar_lea.vmem %s4, 8
        %v264 = vld [vmem:[%s263] sm:$0xff]
        %s265 = scalar_lea.vmem %s4, 16
        %v266 = vld [vmem:[%s265] sm:$0xff]
        %v267 = vld [vmem:[%s5] sm:$0x1]
        %s268 = scalar_lea.vmem %s5, 1
        %v269 = vld [vmem:[%s268] sm:$0x1]
        %v270 = vld [vmem:[%s2] sm:$0xff]
        %v271 = vld [vmem:[%s259] sm:$0xff]
        %273 = vset.pattern.permute.xlu0 0
        %274 = vperm.xlu0 %273, %v262
        %v275 = vpop.permute.xlu0 %274
        %vm277 = vcmask 64512
        %v279 = vsel %vm277, %v260, 0
        %281 = vmatprep.subr.mxu0 0.0
        %282 = vmatpush1.msra.mxu0 %v271
        %283 = vmatprep.subr.mxu0 0.0
        %284 = vmatpush1.msra.mxu0 0.0
        %285 = vmatprep.subr.mxu0 0.0
        %286 = vmatpush1.msra.mxu0 0.0
        %287 = vmatprep.subr.mxu0 0.0
        %288 = vmatpush1.msra.mxu0 0.0
        %289 = vmatprep.subr.mxu0 0.0
        %290 = vmatpush1.msra.mxu0 0.0
        %291 = vmatprep.subr.mxu0 0.0
        %292 = vmatpush1.msra.mxu0 0.0
        %293 = vmatprep.subr.mxu0 0.0
        %294 = vmatpush1.msra.mxu0 0.0
        %295 = vmatprep.subr.mxu0 0.0
        %296 = vmatpush1.msra.mxu0 0.0
        %297 = vmatprep.subr.mxu0 0.0
        %298 = vmatpush1.msra.mxu0 0.0
        %299 = vmatprep.subr.mxu0 0.0
        %300 = vmatpush1.msra.mxu0 0.0
        %301 = vmatprep.subr.mxu0 0.0
        %302 = vmatpush1.msra.mxu0 0.0
        %303 = vmatprep.subr.mxu0 0.0
        %304 = vmatpush1.msra.mxu0 0.0
        %305 = vmatprep.subr.mxu0 0.0
        %306 = vmatpush1.msra.mxu0 0.0
        %307 = vmatprep.subr.mxu0 0.0
        %308 = vmatpush1.msra.mxu0 0.0
        %309 = vmatprep.subr.mxu0 0.0
        %310 = vmatpush1.msra.mxu0 0.0
        %311 = vmatprep.subr.mxu0 0.0
        %312 = vmatpush1.msra.mxu0 0.0
        %313 = vmatprep.subr.mxu0 0.0
        %314 = vmatpush1.msra.mxu0 0.0
        %315 = vmatprep.subr.mxu0 0.0
        %316 = vmatpush1.msra.mxu0 0.0
        %317 = vmatprep.subr.mxu0 0.0
        %318 = vmatpush1.msra.mxu0 0.0
        %319 = vmatprep.subr.mxu0 0.0
        %320 = vmatpush1.msra.mxu0 0.0
        %321 = vmatprep.subr.mxu0 0.0
        %322 = vmatpush1.msra.mxu0 0.0
        %323 = vmatprep.subr.mxu0 0.0
        %324 = vmatpush1.msra.mxu0 0.0
        %325 = vmatprep.subr.mxu0 0.0
        %326 = vmatpush1.msra.mxu0 0.0
        %327 = vmatprep.subr.mxu0 0.0
        %328 = vmatpush1.msra.mxu0 0.0
        %329 = vmatprep.subr.mxu0 0.0
        %330 = vmatpush1.msra.mxu0 0.0
        %331 = vmatprep.subr.mxu0 0.0
        %332 = vmatpush1.msra.mxu0 0.0
        %333 = vmatprep.subr.mxu0 0.0
        %334 = vmatpush1.msra.mxu0 0.0
        %335 = vmatprep.subr.mxu0 0.0
        %336 = vmatpush1.msra.mxu0 0.0
        %337 = vmatprep.subr.mxu0 0.0
        %338 = vmatpush1.msra.mxu0 0.0
        %339 = vmatprep.subr.mxu0 0.0
        %340 = vmatpush1.msra.mxu0 0.0
        %341 = vmatprep.subr.mxu0 0.0
        %342 = vmatpush1.msra.mxu0 0.0
        %343 = vmatprep.subr.mxu0 0.0
        %344 = vmatpush1.msra.mxu0 0.0
        %345 = vmatprep.mubr.f32.mxu0 0.0
        %346 = vmatmul.mubr.f32.gmra.mrb[0].mxu0 %v279
        %v347 = vpop.f32.mrb[0].mxu0
        %v348 = vadd.f32 %v275, %v347
        %v349 = vpop.f32.mrb[0].mxu0
        %350 = vdwg.mxu0
        %v351 = vxor.u32 %v348, 2147483648
        %v352 = vmul.f32 %v351, 1.442695
        %v353 = vpow.pop %v352
        %v354 = vadd.f32 %v353, 1.0
        %v355 = vrcp.pop %v354
        %v356 = vmul.f32 1.0, %v355
        %v357 = vmul.f32 %v348, %v356
        %vm358 = vcmask 1047680
        %359 = vrot.lane.b32.xlu0 %v357, 16
        %v360 = vpop.permute.xlu0 %359
        %v361 = vsel %vm358, %v360, %v357
        %362 = vrot.lane.b32.xlu0 %v361, 16
        %v363 = vpop.permute.xlu0 %362
        %v364 = vsel %vm358, %v363, %v357
        %v366 = vlaneseq
        %v367 = vshrl.u32 %v366, 7
        %v368 = vsub.s32 0, %v367
        %v369 = vrot.slane %v267, %v368
        %370 = vrot.lane.b32.xlu0 %v369, 15
        %v371 = vpop.permute.xlu0 %370
        %v373 = vmul.f32 %v364, %v371
        %v375 = vlaneseq
        %v376 = vshrl.u32 %v375, 7
        %v377 = vsub.s32 0, %v376
        %v378 = vrot.slane %v269, %v377
        %379 = vrot.lane.b32.xlu0 %v378, 1
        %v380 = vpop.permute.xlu0 %379
        %v382 = vmul.f32 %v364, %v380
        %384 = vrot.lane.b32.xlu0 %v357, 15
        %v385 = vpop.permute.xlu0 %384
        %387 = vrot.lane.b32.xlu0 %v382, 14
        %v388 = vpop.permute.xlu0 %387
        %390 = vset.pattern.permute.xlu0 0
        %391 = vperm.xlu0 %390, %v264
        %v392 = vpop.permute.xlu0 %391
        %395 = vrot.lane.b32.xlu0 %v373, 113
        %v396 = vpop.permute.xlu0 %395
        %397 = vrot.lane.b32.xlu0 %v385, 113
        %v398 = vpop.permute.xlu0 %397
        %399 = vrot.lane.b32.xlu0 %v388, 113
        %v400 = vpop.permute.xlu0 %399
        %vm404 = vcmask 195584
        %v406 = vsel %vm404, %v270, 0
        %408 = vmatprep.subr.mxu0 0.0
        %409 = vmatpush1.msra.mxu0 %v396
        %410 = vmatprep.subr.mxu0 0.0
        %411 = vmatpush1.msra.mxu0 %v398
        %412 = vmatprep.subr.mxu0 0.0
        %413 = vmatpush1.msra.mxu0 %v400
        %414 = vmatprep.subr.mxu0 0.0
        %415 = vmatpush1.msra.mxu0 0.0
        %416 = vmatprep.subr.mxu0 0.0
        %417 = vmatpush1.msra.mxu0 0.0
        %418 = vmatprep.subr.mxu0 0.0
        %419 = vmatpush1.msra.mxu0 0.0
        %420 = vmatprep.subr.mxu0 0.0
        %421 = vmatpush1.msra.mxu0 0.0
        %422 = vmatprep.subr.mxu0 0.0
        %423 = vmatpush1.msra.mxu0 0.0
        %424 = vmatprep.subr.mxu0 0.0
        %425 = vmatpush1.msra.mxu0 0.0
        %426 = vmatprep.subr.mxu0 0.0
        %427 = vmatpush1.msra.mxu0 0.0
        %428 = vmatprep.subr.mxu0 0.0
        %429 = vmatpush1.msra.mxu0 0.0
        %430 = vmatprep.subr.mxu0 0.0
        %431 = vmatpush1.msra.mxu0 0.0
        %432 = vmatprep.subr.mxu0 0.0
        %433 = vmatpush1.msra.mxu0 0.0
        %434 = vmatprep.subr.mxu0 0.0
        %435 = vmatpush1.msra.mxu0 0.0
        %436 = vmatprep.subr.mxu0 0.0
        %437 = vmatpush1.msra.mxu0 0.0
        %438 = vmatprep.subr.mxu0 0.0
        %439 = vmatpush1.msra.mxu0 0.0
        %440 = vmatprep.subr.mxu0 0.0
        %441 = vmatpush1.msra.mxu0 0.0
        %442 = vmatprep.subr.mxu0 0.0
        %443 = vmatpush1.msra.mxu0 0.0
        %444 = vmatprep.subr.mxu0 0.0
        %445 = vmatpush1.msra.mxu0 0.0
        %446 = vmatprep.subr.mxu0 0.0
        %447 = vmatpush1.msra.mxu0 0.0
        %448 = vmatprep.subr.mxu0 0.0
        %449 = vmatpush1.msra.mxu0 0.0
        %450 = vmatprep.subr.mxu0 0.0
        %451 = vmatpush1.msra.mxu0 0.0
        %452 = vmatprep.subr.mxu0 0.0
        %453 = vmatpush1.msra.mxu0 0.0
        %454 = vmatprep.subr.mxu0 0.0
        %455 = vmatpush1.msra.mxu0 0.0
        %456 = vmatprep.subr.mxu0 0.0
        %457 = vmatpush1.msra.mxu0 0.0
        %458 = vmatprep.subr.mxu0 0.0
        %459 = vmatpush1.msra.mxu0 0.0
        %460 = vmatprep.subr.mxu0 0.0
        %461 = vmatpush1.msra.mxu0 0.0
        %462 = vmatprep.subr.mxu0 0.0
        %463 = vmatpush1.msra.mxu0 0.0
        %464 = vmatprep.subr.mxu0 0.0
        %465 = vmatpush1.msra.mxu0 0.0
        %466 = vmatprep.subr.mxu0 0.0
        %467 = vmatpush1.msra.mxu0 0.0
        %468 = vmatprep.subr.mxu0 0.0
        %469 = vmatpush1.msra.mxu0 0.0
        %470 = vmatprep.subr.mxu0 0.0
        %471 = vmatpush1.msra.mxu0 0.0
        %472 = vmatprep.mubr.f32.mxu0 0.0
        %473 = vmatmul.mubr.f32.gmra.mrb[0].mxu0 %v406
        %v474 = vpop.f32.mrb[0].mxu0
        %v475 = vadd.f32 %v392, %v474
        %v476 = vpop.f32.mrb[0].mxu0
        %477 = vdwg.mxu0
        %v478 = vxor.u32 %v475, 2147483648
        %v479 = vmul.f32 %v478, 1.442695
        %v480 = vpow.pop %v479
        %v481 = vadd.f32 %v480, 1.0
        %v482 = vrcp.pop %v481
        %v483 = vmul.f32 1.0, %v482
        %v484 = vmul.f32 %v475, %v483
        %486 = vset.pattern.permute.xlu0 0
        %487 = vperm.xlu0 %486, %v266
        %v488 = vpop.permute.xlu0 %487
        %v491 = vsel %vm277, %v261, 0
        %493 = vmatprep.subr.mxu0 0.0
        %494 = vmatpush1.msra.mxu0 %v271
        %495 = vmatprep.subr.mxu0 0.0
        %496 = vmatpush1.msra.mxu0 0.0
        %497 = vmatprep.subr.mxu0 0.0
        %498 = vmatpush1.msra.mxu0 0.0
        %499 = vmatprep.subr.mxu0 0.0
        %500 = vmatpush1.msra.mxu0 0.0
        %501 = vmatprep.subr.mxu0 0.0
        %502 = vmatpush1.msra.mxu0 0.0
        %503 = vmatprep.subr.mxu0 0.0
        %504 = vmatpush1.msra.mxu0 0.0
        %505 = vmatprep.subr.mxu0 0.0
        %506 = vmatpush1.msra.mxu0 0.0
        %507 = vmatprep.subr.mxu0 0.0
        %508 = vmatpush1.msra.mxu0 0.0
        %509 = vmatprep.subr.mxu0 0.0
        %510 = vmatpush1.msra.mxu0 0.0
        %511 = vmatprep.subr.mxu0 0.0
        %512 = vmatpush1.msra.mxu0 0.0
        %513 = vmatprep.subr.mxu0 0.0
        %514 = vmatpush1.msra.mxu0 0.0
        %515 = vmatprep.subr.mxu0 0.0
        %516 = vmatpush1.msra.mxu0 0.0
        %517 = vmatprep.subr.mxu0 0.0
        %518 = vmatpush1.msra.mxu0 0.0
        %519 = vmatprep.subr.mxu0 0.0
        %520 = vmatpush1.msra.mxu0 0.0
        %521 = vmatprep.subr.mxu0 0.0
        %522 = vmatpush1.msra.mxu0 0.0
        %523 = vmatprep.subr.mxu0 0.0
        %524 = vmatpush1.msra.mxu0 0.0
        %525 = vmatprep.subr.mxu0 0.0
        %526 = vmatpush1.msra.mxu0 0.0
        %527 = vmatprep.subr.mxu0 0.0
        %528 = vmatpush1.msra.mxu0 0.0
        %529 = vmatprep.subr.mxu0 0.0
        %530 = vmatpush1.msra.mxu0 0.0
        %531 = vmatprep.subr.mxu0 0.0
        %532 = vmatpush1.msra.mxu0 0.0
        %533 = vmatprep.subr.mxu0 0.0
        %534 = vmatpush1.msra.mxu0 0.0
        %535 = vmatprep.subr.mxu0 0.0
        %536 = vmatpush1.msra.mxu0 0.0
        %537 = vmatprep.subr.mxu0 0.0
        %538 = vmatpush1.msra.mxu0 0.0
        %539 = vmatprep.subr.mxu0 0.0
        %540 = vmatpush1.msra.mxu0 0.0
        %541 = vmatprep.subr.mxu0 0.0
        %542 = vmatpush1.msra.mxu0 0.0
        %543 = vmatprep.subr.mxu0 0.0
        %544 = vmatpush1.msra.mxu0 0.0
        %545 = vmatprep.subr.mxu0 0.0
        %546 = vmatpush1.msra.mxu0 0.0
        %547 = vmatprep.subr.mxu0 0.0
        %548 = vmatpush1.msra.mxu0 0.0
        %549 = vmatprep.subr.mxu0 0.0
        %550 = vmatpush1.msra.mxu0 0.0
        %551 = vmatprep.subr.mxu0 0.0
        %552 = vmatpush1.msra.mxu0 0.0
        %553 = vmatprep.subr.mxu0 0.0
        %554 = vmatpush1.msra.mxu0 0.0
        %555 = vmatprep.subr.mxu0 0.0
        %556 = vmatpush1.msra.mxu0 0.0
        %557 = vmatprep.mubr.f32.mxu0 0.0
        %558 = vmatmul.mubr.f32.gmra.mrb[0].mxu0 %v491
        %v559 = vpop.f32.mrb[0].mxu0
        %v560 = vadd.f32 %v488, %v559
        %v561 = vpop.f32.mrb[0].mxu0
        %562 = vdwg.mxu0
        %v563 = vxor.u32 %v560, 2147483648
        %v564 = vmul.f32 %v563, 1.442695
        %v565 = vpow.pop %v564
        %v566 = vadd.f32 %v565, 1.0
        %v567 = vrcp.pop %v566
        %v568 = vmul.f32 1.0, %v567
        %v569 = vmul.f32 %v560, %v568
        %v570 = vadd.f32 %v484, %v569
        %vm571 = vcmask 130048
        %572 = vst.msk [vmem:[%s255] sm:$0xff] %vm571, %v570
        %s573 = sand.u32 %s160, 1
        %s574 = scalar_lea.sflag [#allocation4], %s573
        %s575 = sand.u32 %s160, 1
        %s576 = smul.addr %s575, 8
        %s577 = scalar_lea.vmem [#allocation5], %s576
        // Predicated region
        $region49: #{tpu_custom_call.1} parent=43 // pred_check
          %p578 = pneg %p170
        $region50: #{tpu_custom_call.1} parent=43 // pred_check_branch
          %580 = sbr.rel (%p578) target = $region52
        $region51: #{tpu_custom_call.1} parent=43 // pred_region
          %s582 = ssub.s32 128, 128
          %583 = vsyncadd %s574, %s582
          %s584 = smul.addr %s21, 128
          %s585 = scalar_lea.hbm %s6, %s584
          %s587 = sshll.u32 %s577, 4
          %s588 = int_to_ptr.vmem [resolvable:$true] %s587
          %590 = dma.vmem_to_hbm [thread:$0]  %s588, 128, %s585, %s574
        $region52: #{tpu_custom_call.1} parent=43 // pred_fallthru
          _
      $region44: #{tpu_custom_call.1} parent=5 // pred_fallthru
        _
      %p591 = scmp.le.s32.totalorder 2, %s16
      // Predicated region
      $region53: #{tpu_custom_call.1} parent=5 // pred_check
        %p592 = pneg %p591
      $region54: #{tpu_custom_call.1} parent=5 // pred_check_branch
        %594 = sbr.rel (%p592) target = $region56
      $region55: #{tpu_custom_call.1} parent=5 // pred_region
        %s595 = ssub.s32 %s16, 2
        // Predicated region
        $region57: #{tpu_custom_call.1} parent=55 // pred_check
          %p596 = pneg %p176
        $region58: #{tpu_custom_call.1} parent=55 // pred_check_branch
          %598 = sbr.rel (%p596) target = $region60
        $region59: #{tpu_custom_call.1} parent=55 // pred_region
          %s599 = sand.u32 %s161, 1
          %s600 = scalar_lea.sflag [#allocation4], %s599
          %s601 = sand.u32 %s161, 1
          %s602 = smul.addr %s601, 8
          %s603 = scalar_lea.vmem [#allocation5], %s602
          %604 = dma.done %s600, 128
        $region60: #{tpu_custom_call.1} parent=55 // pred_fallthru
          _
      $region56: #{tpu_custom_call.1} parent=5 // pred_fallthru
        _
    $region6: #{tpu_custom_call.1} parent=1 // loop_footer
      %s20 = sadd.s32 1, %s16
    $region7: #{tpu_custom_call.1} parent=1 // loop_footer_branch
      %15 = sbr.rel target = $region3
    $region8: #{tpu_custom_call.1} parent=1 // loop_exit
      _
    %605 = vsyncpa [#allocation3], 1
    %s606 = scalar_lea.sflag [#allocation3], 1
    %607 = vsyncpa %s606, 1
    %608 = vsyncpa [#allocation4], 1
    %s609 = scalar_lea.sflag [#allocation4], 1
    %610 = vsyncpa %s609, 1

</llo_original>
